<compile_context>
chip_gen: v5e
topology: v5e:2x2
jax: 0.10.0
libtpu: 0.0.40
codegen_flags: <defaults>
</compile_context>

<pallas_src>
import jax
import jax.numpy as jnp
from jax.experimental import pallas as pl
from jax.experimental.pallas import tpu as pltpu

HIDDEN = 32
INPUT = 10
NUM_LAYERS = 2
OUTPUT = 2


def lstm_fc_kernel(x2d_ref,                     # (T*B, INPUT)
                   wih0_ref, whh0_ref, b0_ref,  # (INPUT,4H) (H,4H) (1,4H)  [i,f,o,g]
                   w1_ref, b1_ref,              # (2H,4H)   (1,4H)          [i,f,o,g]
                   wfc_ref, bfc_ref,            # (H,OUT)   (1,OUT)
                   out_ref):                    # (B, OUT)
    H = whh0_ref.shape[0]
    B = out_ref.shape[0]
    T = x2d_ref.shape[0] // B

    # ---- loop-invariant loads / broadcasts (hoisted once) -------------------
    whh0 = whh0_ref[...]                                   # (H, 4H)
    w1 = w1_ref[...]                                       # (2H, 4H)
    b1 = jnp.broadcast_to(b1_ref[...], (B, 4 * H))         # (B, 4H)

    # ---- layer-0 input projection for ALL timesteps: one big MXU matmul -----
    # (T*B, INPUT) @ (INPUT, 4H) + b0  -> rows [t*B:(t+1)*B] belong to step t.
    gx_all = (jnp.dot(x2d_ref[...], wih0_ref[...],
                      preferred_element_type=jnp.float32)
              + b0_ref[...])                               # (T*B, 4H)

    def gates(g):
        # gate columns ordered [i, f, o, g_cell]: one sigmoid over 3H lanes,
        # one tanh over H lanes (2 EUP calls per cell instead of 4).
        s = jax.nn.sigmoid(g[:, :3 * H])
        i = s[:, 0 * H:1 * H]
        f = s[:, 1 * H:2 * H]
        o = s[:, 2 * H:3 * H]
        gg = jnp.tanh(g[:, 3 * H:4 * H])
        return i, f, o, gg

    zeros = jnp.zeros((B, H), jnp.float32)
    h0, c0, h1, c1 = zeros, zeros, zeros, zeros

    # Fully unrolled time loop (T static, small): cross-timestep scheduling.
    for t in range(T):
        # ---- layer 0: only the recurrent matmul remains on the serial path --
        gx = gx_all[t * B:(t + 1) * B, :]                  # (B, 4H) static slice
        g0 = gx + jnp.dot(h0, whh0, preferred_element_type=jnp.float32)
        i0, f0, o0, gg0 = gates(g0)
        c0 = f0 * c0 + i0 * gg0
        h0 = o0 * jnp.tanh(c0)

        # ---- layer 1: fused ih+hh matmul via [h0, h1] concat -----------------
        xh = jnp.concatenate([h0, h1], axis=1)             # (B, 2H)
        g1 = jnp.dot(xh, w1, preferred_element_type=jnp.float32) + b1
        i1, f1, o1, gg1 = gates(g1)
        c1 = f1 * c1 + i1 * gg1
        h1 = o1 * jnp.tanh(c1)

    # ---- final Linear on last timestep's layer-1 hidden state ----------------
    out_ref[...] = (jnp.dot(h1, wfc_ref[...], preferred_element_type=jnp.float32)
                    + bfc_ref[...])


def _reorder_gates(w):
    """Permute the last (4H) axis from PyTorch [i, f, g, o] to [i, f, o, g]."""
    i, f, g, o = jnp.split(w, 4, axis=-1)
    return jnp.concatenate([i, f, o, g], axis=-1)


def lstm_model_forward(x, params):
    """x: (B, T, INPUT) batch-first, like the PyTorch module. Returns (B, OUTPUT)."""
    B, T, D = x.shape
    # time-major, then flatten (T, B) so row t*B+b is (timestep t, batch b).
    x2d = jnp.transpose(x, (1, 0, 2)).astype(jnp.float32).reshape(T * B, D)

    # One-time layout plumbing: reorder gate columns, stack layer-1 weights.
    wih0 = _reorder_gates(params["wih0"])
    whh0 = _reorder_gates(params["whh0"])
    b0 = _reorder_gates(params["b0"])
    w1 = jnp.concatenate([_reorder_gates(params["wih1"]),
                          _reorder_gates(params["whh1"])], axis=0)   # (2H, 4H)
    b1 = _reorder_gates(params["b1"])

    args = (x2d, wih0, whh0, b0, w1, b1, params["wfc"], params["bfc"])

    vmem = pl.BlockSpec(memory_space=pltpu.MemorySpace.VMEM)
    # TODO(synk): at larger B, add a grid over batch tiles with
    # dimension_semantics=("parallel",) to use both v7x TensorCores; B=2 here.
    return pl.pallas_call(
        lstm_fc_kernel,
        out_shape=jax.ShapeDtypeStruct((B, OUTPUT), jnp.float32),
        in_specs=[vmem] * len(args),
        out_specs=vmem,
    )(*args)


def init_params(key):
    """Deterministic init matching PyTorch shapes (uniform(-1/sqrt(H), 1/sqrt(H))).

    Weights are stored transposed to (in_dim, 4H) / (H, OUT); gate order is
    PyTorch's [i, f, g, o] (the wrapper reorders for the kernel)."""
    k = 1.0 / jnp.sqrt(jnp.float32(HIDDEN))
    keys = jax.random.split(key, 12)

    def u(kk, shape):
        return jax.random.uniform(kk, shape, jnp.float32, -k, k)

    wih0 = u(keys[0], (4 * HIDDEN, INPUT)).T
    whh0 = u(keys[1], (4 * HIDDEN, HIDDEN)).T
    b0 = (u(keys[2], (4 * HIDDEN,)) + u(keys[3], (4 * HIDDEN,))).reshape(1, -1)
    wih1 = u(keys[4], (4 * HIDDEN, HIDDEN)).T
    whh1 = u(keys[5], (4 * HIDDEN, HIDDEN)).T
    b1 = (u(keys[6], (4 * HIDDEN,)) + u(keys[7], (4 * HIDDEN,))).reshape(1, -1)
    kf = 1.0 / jnp.sqrt(jnp.float32(HIDDEN))
    wfc = jax.random.uniform(keys[8], (OUTPUT, HIDDEN), jnp.float32, -kf, kf).T
    bfc = jax.random.uniform(keys[9], (OUTPUT,), jnp.float32, -kf, kf).reshape(1, -1)

    return dict(wih0=wih0, whh0=whh0, b0=b0,
                wih1=wih1, whh1=whh1, b1=b1,
                wfc=wfc, bfc=bfc)


def reference_forward(x, params):
    """Pure-JAX reference with PyTorch semantics (gate order [i, f, g, o])."""
    B, T, _ = x.shape
    H = HIDDEN

    def cell(x_t, h, c, wih, whh, b):
        g = x_t @ wih + h @ whh + b
        i = jax.nn.sigmoid(g[:, 0 * H:1 * H])
        f = jax.nn.sigmoid(g[:, 1 * H:2 * H])
        gg = jnp.tanh(g[:, 2 * H:3 * H])
        o = jax.nn.sigmoid(g[:, 3 * H:4 * H])
        c = f * c + i * gg
        h = o * jnp.tanh(c)
        return h, c

    h0 = c0 = h1 = c1 = jnp.zeros((B, H), jnp.float32)
    for t in range(T):
        x_t = x[:, t, :].astype(jnp.float32)
        h0, c0 = cell(x_t, h0, c0, params["wih0"], params["whh0"], params["b0"])
        h1, c1 = cell(h0, h1, c1, params["wih1"], params["whh1"], params["b1"])
    return h1 @ params["wfc"] + params["bfc"]


if __name__ == "__main__":
    key = jax.random.PRNGKey(0)
    k_param, k_x = jax.random.split(key)

    B, T = 2, 8
    x = jax.random.normal(k_x, (B, T, INPUT), jnp.float32)
    params = init_params(k_param)

    out = lstm_model_forward(x, params)
    out = jax.block_until_ready(out)

    ref = reference_forward(x, params)
    assert out.shape == (B, OUTPUT)
    assert jnp.allclose(out, ref, atol=1e-4, rtol=1e-4), (out, ref)

    print("KERNEL_OK")
</pallas_src>

<mosaic_0001>
module attributes {stable_mosaic.version = 11 : i64} {
  func.func @lstm_fc_kernel(%arg0: memref<16x10xf32, #tpu.memory_space<vmem>>, %arg1: memref<10x128xf32, #tpu.memory_space<vmem>>, %arg2: memref<32x128xf32, #tpu.memory_space<vmem>>, %arg3: memref<1x128xf32, #tpu.memory_space<vmem>>, %arg4: memref<64x128xf32, #tpu.memory_space<vmem>>, %arg5: memref<1x128xf32, #tpu.memory_space<vmem>>, %arg6: memref<32x2xf32, #tpu.memory_space<vmem>>, %arg7: memref<1x2xf32, #tpu.memory_space<vmem>>, %arg8: memref<2x2xf32, #tpu.memory_space<vmem>>) attributes {dimension_semantics = [], scalar_prefetch = 0 : i64, scratch_operands = 0 : i64, tpu.core_type = #tpu.core_type<tc>} {
    %c0 = arith.constant 0 : index
    %c0_0 = arith.constant 0 : index
    %0 = vector.load %arg2[%c0, %c0_0] : memref<32x128xf32, #tpu.memory_space<vmem>>, vector<32x128xf32>
    %c0_1 = arith.constant 0 : index
    %c0_2 = arith.constant 0 : index
    %1 = vector.load %arg4[%c0_1, %c0_2] : memref<64x128xf32, #tpu.memory_space<vmem>>, vector<64x128xf32>
    %c0_3 = arith.constant 0 : index
    %c0_4 = arith.constant 0 : index
    %2 = vector.load %arg5[%c0_3, %c0_4] : memref<1x128xf32, #tpu.memory_space<vmem>>, vector<1x128xf32>
    %3 = vector.shape_cast %2 : vector<1x128xf32> to vector<1x128xf32>
    %4 = vector.broadcast %3 : vector<1x128xf32> to vector<2x128xf32>
    %c0_5 = arith.constant 0 : index
    %c0_6 = arith.constant 0 : index
    %5 = vector.load %arg0[%c0_5, %c0_6] : memref<16x10xf32, #tpu.memory_space<vmem>>, vector<16x10xf32>
    %c0_7 = arith.constant 0 : index
    %c0_8 = arith.constant 0 : index
    %6 = vector.load %arg1[%c0_7, %c0_8] : memref<10x128xf32, #tpu.memory_space<vmem>>, vector<10x128xf32>
    %cst = arith.constant dense<0.000000e+00> : vector<16x128xf32>
    %7 = tpu.matmul %5, %6, %cst {dimension_numbers = #tpu.dot_dimension_numbers<[1], [0], [0], [1], [0, 0, 1, 1], [], []>} : vector<16x10xf32>, vector<10x128xf32>, vector<16x128xf32> -> vector<16x128xf32>
    %c0_9 = arith.constant 0 : index
    %c0_10 = arith.constant 0 : index
    %8 = vector.load %arg3[%c0_9, %c0_10] : memref<1x128xf32, #tpu.memory_space<vmem>>, vector<1x128xf32>
    %9 = vector.broadcast %8 : vector<1x128xf32> to vector<16x128xf32>
    %10 = arith.addf %7, %9 : vector<16x128xf32>
    %cst_11 = arith.constant 0.000000e+00 : f32
    %11 = vector.broadcast %cst_11 : f32 to vector<2x32xf32>
    %12 = vector.extract_strided_slice %10 {offsets = [0, 0], sizes = [2, 128], strides = [1, 1]} : vector<16x128xf32> to vector<2x128xf32>
    %cst_12 = arith.constant dense<0.000000e+00> : vector<2x128xf32>
    %13 = tpu.matmul %11, %0, %cst_12 {dimension_numbers = #tpu.dot_dimension_numbers<[1], [0], [0], [1], [0, 0, 1, 1], [], []>} : vector<2x32xf32>, vector<32x128xf32>, vector<2x128xf32> -> vector<2x128xf32>
    %14 = arith.addf %12, %13 : vector<2x128xf32>
    %15 = vector.extract_strided_slice %14 {offsets = [0, 0], sizes = [2, 96], strides = [1, 1]} : vector<2x128xf32> to vector<2x96xf32>
    %16 = arith.negf %15 : vector<2x96xf32>
    %17 = math.exp %16 : vector<2x96xf32>
    %cst_13 = arith.constant 1.000000e+00 : f32
    %18 = vector.broadcast %cst_13 : f32 to vector<2x96xf32>
    %19 = arith.addf %18, %17 : vector<2x96xf32>
    %20 = arith.divf %18, %19 : vector<2x96xf32>
    %21 = vector.extract_strided_slice %20 {offsets = [0, 0], sizes = [2, 32], strides = [1, 1]} : vector<2x96xf32> to vector<2x32xf32>
    %22 = vector.extract_strided_slice %20 {offsets = [0, 32], sizes = [2, 32], strides = [1, 1]} : vector<2x96xf32> to vector<2x32xf32>
    %23 = vector.extract_strided_slice %20 {offsets = [0, 64], sizes = [2, 32], strides = [1, 1]} : vector<2x96xf32> to vector<2x32xf32>
    %24 = vector.extract_strided_slice %14 {offsets = [0, 96], sizes = [2, 32], strides = [1, 1]} : vector<2x128xf32> to vector<2x32xf32>
    %25 = math.tanh %24 : vector<2x32xf32>
    %26 = arith.mulf %22, %11 : vector<2x32xf32>
    %27 = arith.mulf %21, %25 : vector<2x32xf32>
    %28 = arith.addf %26, %27 : vector<2x32xf32>
    %29 = math.tanh %28 : vector<2x32xf32>
    %30 = arith.mulf %23, %29 : vector<2x32xf32>
    %31 = tpu.concatenate %30, %11 in 1 : vector<2x32xf32>, vector<2x32xf32> -> vector<2x64xf32>
    %cst_14 = arith.constant dense<0.000000e+00> : vector<2x128xf32>
    %32 = tpu.matmul %31, %1, %cst_14 {dimension_numbers = #tpu.dot_dimension_numbers<[1], [0], [0], [1], [0, 0, 1, 1], [], []>} : vector<2x64xf32>, vector<64x128xf32>, vector<2x128xf32> -> vector<2x128xf32>
    %33 = arith.addf %32, %4 : vector<2x128xf32>
    %34 = vector.extract_strided_slice %33 {offsets = [0, 0], sizes = [2, 96], strides = [1, 1]} : vector<2x128xf32> to vector<2x96xf32>
    %35 = arith.negf %34 : vector<2x96xf32>
    %36 = math.exp %35 : vector<2x96xf32>
    %cst_15 = arith.constant 1.000000e+00 : f32
    %37 = vector.broadcast %cst_15 : f32 to vector<2x96xf32>
    %38 = arith.addf %37, %36 : vector<2x96xf32>
    %39 = arith.divf %37, %38 : vector<2x96xf32>
    %40 = vector.extract_strided_slice %39 {offsets = [0, 0], sizes = [2, 32], strides = [1, 1]} : vector<2x96xf32> to vector<2x32xf32>
    %41 = vector.extract_strided_slice %39 {offsets = [0, 32], sizes = [2, 32], strides = [1, 1]} : vector<2x96xf32> to vector<2x32xf32>
    %42 = vector.extract_strided_slice %39 {offsets = [0, 64], sizes = [2, 32], strides = [1, 1]} : vector<2x96xf32> to vector<2x32xf32>
    %43 = vector.extract_strided_slice %33 {offsets = [0, 96], sizes = [2, 32], strides = [1, 1]} : vector<2x128xf32> to vector<2x32xf32>
    %44 = math.tanh %43 : vector<2x32xf32>
    %45 = arith.mulf %41, %11 : vector<2x32xf32>
    %46 = arith.mulf %40, %44 : vector<2x32xf32>
    %47 = arith.addf %45, %46 : vector<2x32xf32>
    %48 = math.tanh %47 : vector<2x32xf32>
    %49 = arith.mulf %42, %48 : vector<2x32xf32>
    %50 = vector.extract_strided_slice %10 {offsets = [2, 0], sizes = [2, 128], strides = [1, 1]} : vector<16x128xf32> to vector<2x128xf32>
    %cst_16 = arith.constant dense<0.000000e+00> : vector<2x128xf32>
    %51 = tpu.matmul %30, %0, %cst_16 {dimension_numbers = #tpu.dot_dimension_numbers<[1], [0], [0], [1], [0, 0, 1, 1], [], []>} : vector<2x32xf32>, vector<32x128xf32>, vector<2x128xf32> -> vector<2x128xf32>
    %52 = arith.addf %50, %51 : vector<2x128xf32>
    %53 = vector.extract_strided_slice %52 {offsets = [0, 0], sizes = [2, 96], strides = [1, 1]} : vector<2x128xf32> to vector<2x96xf32>
    %54 = arith.negf %53 : vector<2x96xf32>
    %55 = math.exp %54 : vector<2x96xf32>
    %cst_17 = arith.constant 1.000000e+00 : f32
    %56 = vector.broadcast %cst_17 : f32 to vector<2x96xf32>
    %57 = arith.addf %56, %55 : vector<2x96xf32>
    %58 = arith.divf %56, %57 : vector<2x96xf32>
    %59 = vector.extract_strided_slice %58 {offsets = [0, 0], sizes = [2, 32], strides = [1, 1]} : vector<2x96xf32> to vector<2x32xf32>
    %60 = vector.extract_strided_slice %58 {offsets = [0, 32], sizes = [2, 32], strides = [1, 1]} : vector<2x96xf32> to vector<2x32xf32>
    %61 = vector.extract_strided_slice %58 {offsets = [0, 64], sizes = [2, 32], strides = [1, 1]} : vector<2x96xf32> to vector<2x32xf32>
    %62 = vector.extract_strided_slice %52 {offsets = [0, 96], sizes = [2, 32], strides = [1, 1]} : vector<2x128xf32> to vector<2x32xf32>
    %63 = math.tanh %62 : vector<2x32xf32>
    %64 = arith.mulf %60, %28 : vector<2x32xf32>
    %65 = arith.mulf %59, %63 : vector<2x32xf32>
    %66 = arith.addf %64, %65 : vector<2x32xf32>
    %67 = math.tanh %66 : vector<2x32xf32>
    %68 = arith.mulf %61, %67 : vector<2x32xf32>
    %69 = tpu.concatenate %68, %49 in 1 : vector<2x32xf32>, vector<2x32xf32> -> vector<2x64xf32>
    %cst_18 = arith.constant dense<0.000000e+00> : vector<2x128xf32>
    %70 = tpu.matmul %69, %1, %cst_18 {dimension_numbers = #tpu.dot_dimension_numbers<[1], [0], [0], [1], [0, 0, 1, 1], [], []>} : vector<2x64xf32>, vector<64x128xf32>, vector<2x128xf32> -> vector<2x128xf32>
    %71 = arith.addf %70, %4 : vector<2x128xf32>
    %72 = vector.extract_strided_slice %71 {offsets = [0, 0], sizes = [2, 96], strides = [1, 1]} : vector<2x128xf32> to vector<2x96xf32>
    %73 = arith.negf %72 : vector<2x96xf32>
    %74 = math.exp %73 : vector<2x96xf32>
    %cst_19 = arith.constant 1.000000e+00 : f32
    %75 = vector.broadcast %cst_19 : f32 to vector<2x96xf32>
    %76 = arith.addf %75, %74 : vector<2x96xf32>
    %77 = arith.divf %75, %76 : vector<2x96xf32>
    %78 = vector.extract_strided_slice %77 {offsets = [0, 0], sizes = [2, 32], strides = [1, 1]} : vector<2x96xf32> to vector<2x32xf32>
    %79 = vector.extract_strided_slice %77 {offsets = [0, 32], sizes = [2, 32], strides = [1, 1]} : vector<2x96xf32> to vector<2x32xf32>
    %80 = vector.extract_strided_slice %77 {offsets = [0, 64], sizes = [2, 32], strides = [1, 1]} : vector<2x96xf32> to vector<2x32xf32>
    %81 = vector.extract_strided_slice %71 {offsets = [0, 96], sizes = [2, 32], strides = [1, 1]} : vector<2x128xf32> to vector<2x32xf32>
    %82 = math.tanh %81 : vector<2x32xf32>
    %83 = arith.mulf %79, %47 : vector<2x32xf32>
    %84 = arith.mulf %78, %82 : vector<2x32xf32>
    %85 = arith.addf %83, %84 : vector<2x32xf32>
    %86 = math.tanh %85 : vector<2x32xf32>
    %87 = arith.mulf %80, %86 : vector<2x32xf32>
    %88 = vector.extract_strided_slice %10 {offsets = [4, 0], sizes = [2, 128], strides = [1, 1]} : vector<16x128xf32> to vector<2x128xf32>
    %cst_20 = arith.constant dense<0.000000e+00> : vector<2x128xf32>
    %89 = tpu.matmul %68, %0, %cst_20 {dimension_numbers = #tpu.dot_dimension_numbers<[1], [0], [0], [1], [0, 0, 1, 1], [], []>} : vector<2x32xf32>, vector<32x128xf32>, vector<2x128xf32> -> vector<2x128xf32>
    %90 = arith.addf %88, %89 : vector<2x128xf32>
    %91 = vector.extract_strided_slice %90 {offsets = [0, 0], sizes = [2, 96], strides = [1, 1]} : vector<2x128xf32> to vector<2x96xf32>
    %92 = arith.negf %91 : vector<2x96xf32>
    %93 = math.exp %92 : vector<2x96xf32>
    %cst_21 = arith.constant 1.000000e+00 : f32
    %94 = vector.broadcast %cst_21 : f32 to vector<2x96xf32>
    %95 = arith.addf %94, %93 : vector<2x96xf32>
    %96 = arith.divf %94, %95 : vector<2x96xf32>
    %97 = vector.extract_strided_slice %96 {offsets = [0, 0], sizes = [2, 32], strides = [1, 1]} : vector<2x96xf32> to vector<2x32xf32>
    %98 = vector.extract_strided_slice %96 {offsets = [0, 32], sizes = [2, 32], strides = [1, 1]} : vector<2x96xf32> to vector<2x32xf32>
    %99 = vector.extract_strided_slice %96 {offsets = [0, 64], sizes = [2, 32], strides = [1, 1]} : vector<2x96xf32> to vector<2x32xf32>
    %100 = vector.extract_strided_slice %90 {offsets = [0, 96], sizes = [2, 32], strides = [1, 1]} : vector<2x128xf32> to vector<2x32xf32>
    %101 = math.tanh %100 : vector<2x32xf32>
    %102 = arith.mulf %98, %66 : vector<2x32xf32>
    %103 = arith.mulf %97, %101 : vector<2x32xf32>
    %104 = arith.addf %102, %103 : vector<2x32xf32>
    %105 = math.tanh %104 : vector<2x32xf32>
    %106 = arith.mulf %99, %105 : vector<2x32xf32>
    %107 = tpu.concatenate %106, %87 in 1 : vector<2x32xf32>, vector<2x32xf32> -> vector<2x64xf32>
    %cst_22 = arith.constant dense<0.000000e+00> : vector<2x128xf32>
    %108 = tpu.matmul %107, %1, %cst_22 {dimension_numbers = #tpu.dot_dimension_numbers<[1], [0], [0], [1], [0, 0, 1, 1], [], []>} : vector<2x64xf32>, vector<64x128xf32>, vector<2x128xf32> -> vector<2x128xf32>
    %109 = arith.addf %108, %4 : vector<2x128xf32>
    %110 = vector.extract_strided_slice %109 {offsets = [0, 0], sizes = [2, 96], strides = [1, 1]} : vector<2x128xf32> to vector<2x96xf32>
    %111 = arith.negf %110 : vector<2x96xf32>
    %112 = math.exp %111 : vector<2x96xf32>
    %cst_23 = arith.constant 1.000000e+00 : f32
    %113 = vector.broadcast %cst_23 : f32 to vector<2x96xf32>
    %114 = arith.addf %113, %112 : vector<2x96xf32>
    %115 = arith.divf %113, %114 : vector<2x96xf32>
    %116 = vector.extract_strided_slice %115 {offsets = [0, 0], sizes = [2, 32], strides = [1, 1]} : vector<2x96xf32> to vector<2x32xf32>
    %117 = vector.extract_strided_slice %115 {offsets = [0, 32], sizes = [2, 32], strides = [1, 1]} : vector<2x96xf32> to vector<2x32xf32>
    %118 = vector.extract_strided_slice %115 {offsets = [0, 64], sizes = [2, 32], strides = [1, 1]} : vector<2x96xf32> to vector<2x32xf32>
    %119 = vector.extract_strided_slice %109 {offsets = [0, 96], sizes = [2, 32], strides = [1, 1]} : vector<2x128xf32> to vector<2x32xf32>
    %120 = math.tanh %119 : vector<2x32xf32>
    %121 = arith.mulf %117, %85 : vector<2x32xf32>
    %122 = arith.mulf %116, %120 : vector<2x32xf32>
    %123 = arith.addf %121, %122 : vector<2x32xf32>
    %124 = math.tanh %123 : vector<2x32xf32>
    %125 = arith.mulf %118, %124 : vector<2x32xf32>
    %126 = vector.extract_strided_slice %10 {offsets = [6, 0], sizes = [2, 128], strides = [1, 1]} : vector<16x128xf32> to vector<2x128xf32>
    %cst_24 = arith.constant dense<0.000000e+00> : vector<2x128xf32>
    %127 = tpu.matmul %106, %0, %cst_24 {dimension_numbers = #tpu.dot_dimension_numbers<[1], [0], [0], [1], [0, 0, 1, 1], [], []>} : vector<2x32xf32>, vector<32x128xf32>, vector<2x128xf32> -> vector<2x128xf32>
    %128 = arith.addf %126, %127 : vector<2x128xf32>
    %129 = vector.extract_strided_slice %128 {offsets = [0, 0], sizes = [2, 96], strides = [1, 1]} : vector<2x128xf32> to vector<2x96xf32>
    %130 = arith.negf %129 : vector<2x96xf32>
    %131 = math.exp %130 : vector<2x96xf32>
    %cst_25 = arith.constant 1.000000e+00 : f32
    %132 = vector.broadcast %cst_25 : f32 to vector<2x96xf32>
    %133 = arith.addf %132, %131 : vector<2x96xf32>
    %134 = arith.divf %132, %133 : vector<2x96xf32>
    %135 = vector.extract_strided_slice %134 {offsets = [0, 0], sizes = [2, 32], strides = [1, 1]} : vector<2x96xf32> to vector<2x32xf32>
    %136 = vector.extract_strided_slice %134 {offsets = [0, 32], sizes = [2, 32], strides = [1, 1]} : vector<2x96xf32> to vector<2x32xf32>
    %137 = vector.extract_strided_slice %134 {offsets = [0, 64], sizes = [2, 32], strides = [1, 1]} : vector<2x96xf32> to vector<2x32xf32>
    %138 = vector.extract_strided_slice %128 {offsets = [0, 96], sizes = [2, 32], strides = [1, 1]} : vector<2x128xf32> to vector<2x32xf32>
    %139 = math.tanh %138 : vector<2x32xf32>
    %140 = arith.mulf %136, %104 : vector<2x32xf32>
    %141 = arith.mulf %135, %139 : vector<2x32xf32>
    %142 = arith.addf %140, %141 : vector<2x32xf32>
    %143 = math.tanh %142 : vector<2x32xf32>
    %144 = arith.mulf %137, %143 : vector<2x32xf32>
    %145 = tpu.concatenate %144, %125 in 1 : vector<2x32xf32>, vector<2x32xf32> -> vector<2x64xf32>
    %cst_26 = arith.constant dense<0.000000e+00> : vector<2x128xf32>
    %146 = tpu.matmul %145, %1, %cst_26 {dimension_numbers = #tpu.dot_dimension_numbers<[1], [0], [0], [1], [0, 0, 1, 1], [], []>} : vector<2x64xf32>, vector<64x128xf32>, vector<2x128xf32> -> vector<2x128xf32>
    %147 = arith.addf %146, %4 : vector<2x128xf32>
    %148 = vector.extract_strided_slice %147 {offsets = [0, 0], sizes = [2, 96], strides = [1, 1]} : vector<2x128xf32> to vector<2x96xf32>
    %149 = arith.negf %148 : vector<2x96xf32>
    %150 = math.exp %149 : vector<2x96xf32>
    %cst_27 = arith.constant 1.000000e+00 : f32
    %151 = vector.broadcast %cst_27 : f32 to vector<2x96xf32>
    %152 = arith.addf %151, %150 : vector<2x96xf32>
    %153 = arith.divf %151, %152 : vector<2x96xf32>
    %154 = vector.extract_strided_slice %153 {offsets = [0, 0], sizes = [2, 32], strides = [1, 1]} : vector<2x96xf32> to vector<2x32xf32>
    %155 = vector.extract_strided_slice %153 {offsets = [0, 32], sizes = [2, 32], strides = [1, 1]} : vector<2x96xf32> to vector<2x32xf32>
    %156 = vector.extract_strided_slice %153 {offsets = [0, 64], sizes = [2, 32], strides = [1, 1]} : vector<2x96xf32> to vector<2x32xf32>
    %157 = vector.extract_strided_slice %147 {offsets = [0, 96], sizes = [2, 32], strides = [1, 1]} : vector<2x128xf32> to vector<2x32xf32>
    %158 = math.tanh %157 : vector<2x32xf32>
    %159 = arith.mulf %155, %123 : vector<2x32xf32>
    %160 = arith.mulf %154, %158 : vector<2x32xf32>
    %161 = arith.addf %159, %160 : vector<2x32xf32>
    %162 = math.tanh %161 : vector<2x32xf32>
    %163 = arith.mulf %156, %162 : vector<2x32xf32>
    %164 = vector.extract_strided_slice %10 {offsets = [8, 0], sizes = [2, 128], strides = [1, 1]} : vector<16x128xf32> to vector<2x128xf32>
    %cst_28 = arith.constant dense<0.000000e+00> : vector<2x128xf32>
    %165 = tpu.matmul %144, %0, %cst_28 {dimension_numbers = #tpu.dot_dimension_numbers<[1], [0], [0], [1], [0, 0, 1, 1], [], []>} : vector<2x32xf32>, vector<32x128xf32>, vector<2x128xf32> -> vector<2x128xf32>
    %166 = arith.addf %164, %165 : vector<2x128xf32>
    %167 = vector.extract_strided_slice %166 {offsets = [0, 0], sizes = [2, 96], strides = [1, 1]} : vector<2x128xf32> to vector<2x96xf32>
    %168 = arith.negf %167 : vector<2x96xf32>
    %169 = math.exp %168 : vector<2x96xf32>
    %cst_29 = arith.constant 1.000000e+00 : f32
    %170 = vector.broadcast %cst_29 : f32 to vector<2x96xf32>
    %171 = arith.addf %170, %169 : vector<2x96xf32>
    %172 = arith.divf %170, %171 : vector<2x96xf32>
    %173 = vector.extract_strided_slice %172 {offsets = [0, 0], sizes = [2, 32], strides = [1, 1]} : vector<2x96xf32> to vector<2x32xf32>
    %174 = vector.extract_strided_slice %172 {offsets = [0, 32], sizes = [2, 32], strides = [1, 1]} : vector<2x96xf32> to vector<2x32xf32>
    %175 = vector.extract_strided_slice %172 {offsets = [0, 64], sizes = [2, 32], strides = [1, 1]} : vector<2x96xf32> to vector<2x32xf32>
    %176 = vector.extract_strided_slice %166 {offsets = [0, 96], sizes = [2, 32], strides = [1, 1]} : vector<2x128xf32> to vector<2x32xf32>
    %177 = math.tanh %176 : vector<2x32xf32>
    %178 = arith.mulf %174, %142 : vector<2x32xf32>
    %179 = arith.mulf %173, %177 : vector<2x32xf32>
    %180 = arith.addf %178, %179 : vector<2x32xf32>
    %181 = math.tanh %180 : vector<2x32xf32>
    %182 = arith.mulf %175, %181 : vector<2x32xf32>
    %183 = tpu.concatenate %182, %163 in 1 : vector<2x32xf32>, vector<2x32xf32> -> vector<2x64xf32>
    %cst_30 = arith.constant dense<0.000000e+00> : vector<2x128xf32>
    %184 = tpu.matmul %183, %1, %cst_30 {dimension_numbers = #tpu.dot_dimension_numbers<[1], [0], [0], [1], [0, 0, 1, 1], [], []>} : vector<2x64xf32>, vector<64x128xf32>, vector<2x128xf32> -> vector<2x128xf32>
    %185 = arith.addf %184, %4 : vector<2x128xf32>
    %186 = vector.extract_strided_slice %185 {offsets = [0, 0], sizes = [2, 96], strides = [1, 1]} : vector<2x128xf32> to vector<2x96xf32>
    %187 = arith.negf %186 : vector<2x96xf32>
    %188 = math.exp %187 : vector<2x96xf32>
    %cst_31 = arith.constant 1.000000e+00 : f32
    %189 = vector.broadcast %cst_31 : f32 to vector<2x96xf32>
    %190 = arith.addf %189, %188 : vector<2x96xf32>
    %191 = arith.divf %189, %190 : vector<2x96xf32>
    %192 = vector.extract_strided_slice %191 {offsets = [0, 0], sizes = [2, 32], strides = [1, 1]} : vector<2x96xf32> to vector<2x32xf32>
    %193 = vector.extract_strided_slice %191 {offsets = [0, 32], sizes = [2, 32], strides = [1, 1]} : vector<2x96xf32> to vector<2x32xf32>
    %194 = vector.extract_strided_slice %191 {offsets = [0, 64], sizes = [2, 32], strides = [1, 1]} : vector<2x96xf32> to vector<2x32xf32>
    %195 = vector.extract_strided_slice %185 {offsets = [0, 96], sizes = [2, 32], strides = [1, 1]} : vector<2x128xf32> to vector<2x32xf32>
    %196 = math.tanh %195 : vector<2x32xf32>
    %197 = arith.mulf %193, %161 : vector<2x32xf32>
    %198 = arith.mulf %192, %196 : vector<2x32xf32>
    %199 = arith.addf %197, %198 : vector<2x32xf32>
    %200 = math.tanh %199 : vector<2x32xf32>
    %201 = arith.mulf %194, %200 : vector<2x32xf32>
    %202 = vector.extract_strided_slice %10 {offsets = [10, 0], sizes = [2, 128], strides = [1, 1]} : vector<16x128xf32> to vector<2x128xf32>
    %cst_32 = arith.constant dense<0.000000e+00> : vector<2x128xf32>
    %203 = tpu.matmul %182, %0, %cst_32 {dimension_numbers = #tpu.dot_dimension_numbers<[1], [0], [0], [1], [0, 0, 1, 1], [], []>} : vector<2x32xf32>, vector<32x128xf32>, vector<2x128xf32> -> vector<2x128xf32>
    %204 = arith.addf %202, %203 : vector<2x128xf32>
    %205 = vector.extract_strided_slice %204 {offsets = [0, 0], sizes = [2, 96], strides = [1, 1]} : vector<2x128xf32> to vector<2x96xf32>
    %206 = arith.negf %205 : vector<2x96xf32>
    %207 = math.exp %206 : vector<2x96xf32>
    %cst_33 = arith.constant 1.000000e+00 : f32
    %208 = vector.broadcast %cst_33 : f32 to vector<2x96xf32>
    %209 = arith.addf %208, %207 : vector<2x96xf32>
    %210 = arith.divf %208, %209 : vector<2x96xf32>
    %211 = vector.extract_strided_slice %210 {offsets = [0, 0], sizes = [2, 32], strides = [1, 1]} : vector<2x96xf32> to vector<2x32xf32>
    %212 = vector.extract_strided_slice %210 {offsets = [0, 32], sizes = [2, 32], strides = [1, 1]} : vector<2x96xf32> to vector<2x32xf32>
    %213 = vector.extract_strided_slice %210 {offsets = [0, 64], sizes = [2, 32], strides = [1, 1]} : vector<2x96xf32> to vector<2x32xf32>
    %214 = vector.extract_strided_slice %204 {offsets = [0, 96], sizes = [2, 32], strides = [1, 1]} : vector<2x128xf32> to vector<2x32xf32>
    %215 = math.tanh %214 : vector<2x32xf32>
    %216 = arith.mulf %212, %180 : vector<2x32xf32>
    %217 = arith.mulf %211, %215 : vector<2x32xf32>
    %218 = arith.addf %216, %217 : vector<2x32xf32>
    %219 = math.tanh %218 : vector<2x32xf32>
    %220 = arith.mulf %213, %219 : vector<2x32xf32>
    %221 = tpu.concatenate %220, %201 in 1 : vector<2x32xf32>, vector<2x32xf32> -> vector<2x64xf32>
    %cst_34 = arith.constant dense<0.000000e+00> : vector<2x128xf32>
    %222 = tpu.matmul %221, %1, %cst_34 {dimension_numbers = #tpu.dot_dimension_numbers<[1], [0], [0], [1], [0, 0, 1, 1], [], []>} : vector<2x64xf32>, vector<64x128xf32>, vector<2x128xf32> -> vector<2x128xf32>
    %223 = arith.addf %222, %4 : vector<2x128xf32>
    %224 = vector.extract_strided_slice %223 {offsets = [0, 0], sizes = [2, 96], strides = [1, 1]} : vector<2x128xf32> to vector<2x96xf32>
    %225 = arith.negf %224 : vector<2x96xf32>
    %226 = math.exp %225 : vector<2x96xf32>
    %cst_35 = arith.constant 1.000000e+00 : f32
    %227 = vector.broadcast %cst_35 : f32 to vector<2x96xf32>
    %228 = arith.addf %227, %226 : vector<2x96xf32>
    %229 = arith.divf %227, %228 : vector<2x96xf32>
    %230 = vector.extract_strided_slice %229 {offsets = [0, 0], sizes = [2, 32], strides = [1, 1]} : vector<2x96xf32> to vector<2x32xf32>
    %231 = vector.extract_strided_slice %229 {offsets = [0, 32], sizes = [2, 32], strides = [1, 1]} : vector<2x96xf32> to vector<2x32xf32>
    %232 = vector.extract_strided_slice %229 {offsets = [0, 64], sizes = [2, 32], strides = [1, 1]} : vector<2x96xf32> to vector<2x32xf32>
    %233 = vector.extract_strided_slice %223 {offsets = [0, 96], sizes = [2, 32], strides = [1, 1]} : vector<2x128xf32> to vector<2x32xf32>
    %234 = math.tanh %233 : vector<2x32xf32>
    %235 = arith.mulf %231, %199 : vector<2x32xf32>
    %236 = arith.mulf %230, %234 : vector<2x32xf32>
    %237 = arith.addf %235, %236 : vector<2x32xf32>
    %238 = math.tanh %237 : vector<2x32xf32>
    %239 = arith.mulf %232, %238 : vector<2x32xf32>
    %240 = vector.extract_strided_slice %10 {offsets = [12, 0], sizes = [2, 128], strides = [1, 1]} : vector<16x128xf32> to vector<2x128xf32>
    %cst_36 = arith.constant dense<0.000000e+00> : vector<2x128xf32>
    %241 = tpu.matmul %220, %0, %cst_36 {dimension_numbers = #tpu.dot_dimension_numbers<[1], [0], [0], [1], [0, 0, 1, 1], [], []>} : vector<2x32xf32>, vector<32x128xf32>, vector<2x128xf32> -> vector<2x128xf32>
    %242 = arith.addf %240, %241 : vector<2x128xf32>
    %243 = vector.extract_strided_slice %242 {offsets = [0, 0], sizes = [2, 96], strides = [1, 1]} : vector<2x128xf32> to vector<2x96xf32>
    %244 = arith.negf %243 : vector<2x96xf32>
    %245 = math.exp %244 : vector<2x96xf32>
    %cst_37 = arith.constant 1.000000e+00 : f32
    %246 = vector.broadcast %cst_37 : f32 to vector<2x96xf32>
    %247 = arith.addf %246, %245 : vector<2x96xf32>
    %248 = arith.divf %246, %247 : vector<2x96xf32>
    %249 = vector.extract_strided_slice %248 {offsets = [0, 0], sizes = [2, 32], strides = [1, 1]} : vector<2x96xf32> to vector<2x32xf32>
    %250 = vector.extract_strided_slice %248 {offsets = [0, 32], sizes = [2, 32], strides = [1, 1]} : vector<2x96xf32> to vector<2x32xf32>
    %251 = vector.extract_strided_slice %248 {offsets = [0, 64], sizes = [2, 32], strides = [1, 1]} : vector<2x96xf32> to vector<2x32xf32>
    %252 = vector.extract_strided_slice %242 {offsets = [0, 96], sizes = [2, 32], strides = [1, 1]} : vector<2x128xf32> to vector<2x32xf32>
    %253 = math.tanh %252 : vector<2x32xf32>
    %254 = arith.mulf %250, %218 : vector<2x32xf32>
    %255 = arith.mulf %249, %253 : vector<2x32xf32>
    %256 = arith.addf %254, %255 : vector<2x32xf32>
    %257 = math.tanh %256 : vector<2x32xf32>
    %258 = arith.mulf %251, %257 : vector<2x32xf32>
    %259 = tpu.concatenate %258, %239 in 1 : vector<2x32xf32>, vector<2x32xf32> -> vector<2x64xf32>
    %cst_38 = arith.constant dense<0.000000e+00> : vector<2x128xf32>
    %260 = tpu.matmul %259, %1, %cst_38 {dimension_numbers = #tpu.dot_dimension_numbers<[1], [0], [0], [1], [0, 0, 1, 1], [], []>} : vector<2x64xf32>, vector<64x128xf32>, vector<2x128xf32> -> vector<2x128xf32>
    %261 = arith.addf %260, %4 : vector<2x128xf32>
    %262 = vector.extract_strided_slice %261 {offsets = [0, 0], sizes = [2, 96], strides = [1, 1]} : vector<2x128xf32> to vector<2x96xf32>
    %263 = arith.negf %262 : vector<2x96xf32>
    %264 = math.exp %263 : vector<2x96xf32>
    %cst_39 = arith.constant 1.000000e+00 : f32
    %265 = vector.broadcast %cst_39 : f32 to vector<2x96xf32>
    %266 = arith.addf %265, %264 : vector<2x96xf32>
    %267 = arith.divf %265, %266 : vector<2x96xf32>
    %268 = vector.extract_strided_slice %267 {offsets = [0, 0], sizes = [2, 32], strides = [1, 1]} : vector<2x96xf32> to vector<2x32xf32>
    %269 = vector.extract_strided_slice %267 {offsets = [0, 32], sizes = [2, 32], strides = [1, 1]} : vector<2x96xf32> to vector<2x32xf32>
    %270 = vector.extract_strided_slice %267 {offsets = [0, 64], sizes = [2, 32], strides = [1, 1]} : vector<2x96xf32> to vector<2x32xf32>
    %271 = vector.extract_strided_slice %261 {offsets = [0, 96], sizes = [2, 32], strides = [1, 1]} : vector<2x128xf32> to vector<2x32xf32>
    %272 = math.tanh %271 : vector<2x32xf32>
    %273 = arith.mulf %269, %237 : vector<2x32xf32>
    %274 = arith.mulf %268, %272 : vector<2x32xf32>
    %275 = arith.addf %273, %274 : vector<2x32xf32>
    %276 = math.tanh %275 : vector<2x32xf32>
    %277 = arith.mulf %270, %276 : vector<2x32xf32>
    %278 = vector.extract_strided_slice %10 {offsets = [14, 0], sizes = [2, 128], strides = [1, 1]} : vector<16x128xf32> to vector<2x128xf32>
    %cst_40 = arith.constant dense<0.000000e+00> : vector<2x128xf32>
    %279 = tpu.matmul %258, %0, %cst_40 {dimension_numbers = #tpu.dot_dimension_numbers<[1], [0], [0], [1], [0, 0, 1, 1], [], []>} : vector<2x32xf32>, vector<32x128xf32>, vector<2x128xf32> -> vector<2x128xf32>
    %280 = arith.addf %278, %279 : vector<2x128xf32>
    %281 = vector.extract_strided_slice %280 {offsets = [0, 0], sizes = [2, 96], strides = [1, 1]} : vector<2x128xf32> to vector<2x96xf32>
    %282 = arith.negf %281 : vector<2x96xf32>
    %283 = math.exp %282 : vector<2x96xf32>
    %cst_41 = arith.constant 1.000000e+00 : f32
    %284 = vector.broadcast %cst_41 : f32 to vector<2x96xf32>
    %285 = arith.addf %284, %283 : vector<2x96xf32>
    %286 = arith.divf %284, %285 : vector<2x96xf32>
    %287 = vector.extract_strided_slice %286 {offsets = [0, 0], sizes = [2, 32], strides = [1, 1]} : vector<2x96xf32> to vector<2x32xf32>
    %288 = vector.extract_strided_slice %286 {offsets = [0, 32], sizes = [2, 32], strides = [1, 1]} : vector<2x96xf32> to vector<2x32xf32>
    %289 = vector.extract_strided_slice %286 {offsets = [0, 64], sizes = [2, 32], strides = [1, 1]} : vector<2x96xf32> to vector<2x32xf32>
    %290 = vector.extract_strided_slice %280 {offsets = [0, 96], sizes = [2, 32], strides = [1, 1]} : vector<2x128xf32> to vector<2x32xf32>
    %291 = math.tanh %290 : vector<2x32xf32>
    %292 = arith.mulf %288, %256 : vector<2x32xf32>
    %293 = arith.mulf %287, %291 : vector<2x32xf32>
    %294 = arith.addf %292, %293 : vector<2x32xf32>
    %295 = math.tanh %294 : vector<2x32xf32>
    %296 = arith.mulf %289, %295 : vector<2x32xf32>
    %297 = tpu.concatenate %296, %277 in 1 : vector<2x32xf32>, vector<2x32xf32> -> vector<2x64xf32>
    %cst_42 = arith.constant dense<0.000000e+00> : vector<2x128xf32>
    %298 = tpu.matmul %297, %1, %cst_42 {dimension_numbers = #tpu.dot_dimension_numbers<[1], [0], [0], [1], [0, 0, 1, 1], [], []>} : vector<2x64xf32>, vector<64x128xf32>, vector<2x128xf32> -> vector<2x128xf32>
    %299 = arith.addf %298, %4 : vector<2x128xf32>
    %300 = vector.extract_strided_slice %299 {offsets = [0, 0], sizes = [2, 96], strides = [1, 1]} : vector<2x128xf32> to vector<2x96xf32>
    %301 = arith.negf %300 : vector<2x96xf32>
    %302 = math.exp %301 : vector<2x96xf32>
    %cst_43 = arith.constant 1.000000e+00 : f32
    %303 = vector.broadcast %cst_43 : f32 to vector<2x96xf32>
    %304 = arith.addf %303, %302 : vector<2x96xf32>
    %305 = arith.divf %303, %304 : vector<2x96xf32>
    %306 = vector.extract_strided_slice %305 {offsets = [0, 0], sizes = [2, 32], strides = [1, 1]} : vector<2x96xf32> to vector<2x32xf32>
    %307 = vector.extract_strided_slice %305 {offsets = [0, 32], sizes = [2, 32], strides = [1, 1]} : vector<2x96xf32> to vector<2x32xf32>
    %308 = vector.extract_strided_slice %305 {offsets = [0, 64], sizes = [2, 32], strides = [1, 1]} : vector<2x96xf32> to vector<2x32xf32>
    %309 = vector.extract_strided_slice %299 {offsets = [0, 96], sizes = [2, 32], strides = [1, 1]} : vector<2x128xf32> to vector<2x32xf32>
    %310 = math.tanh %309 : vector<2x32xf32>
    %311 = arith.mulf %307, %275 : vector<2x32xf32>
    %312 = arith.mulf %306, %310 : vector<2x32xf32>
    %313 = arith.addf %311, %312 : vector<2x32xf32>
    %314 = math.tanh %313 : vector<2x32xf32>
    %315 = arith.mulf %308, %314 : vector<2x32xf32>
    %c0_44 = arith.constant 0 : index
    %c0_45 = arith.constant 0 : index
    %316 = vector.load %arg6[%c0_44, %c0_45] : memref<32x2xf32, #tpu.memory_space<vmem>>, vector<32x2xf32>
    %cst_46 = arith.constant dense<0.000000e+00> : vector<2x2xf32>
    %317 = tpu.matmul %315, %316, %cst_46 {dimension_numbers = #tpu.dot_dimension_numbers<[1], [0], [0], [1], [0, 0, 1, 1], [], []>} : vector<2x32xf32>, vector<32x2xf32>, vector<2x2xf32> -> vector<2x2xf32>
    %c0_47 = arith.constant 0 : index
    %c0_48 = arith.constant 0 : index
    %318 = vector.load %arg7[%c0_47, %c0_48] : memref<1x2xf32, #tpu.memory_space<vmem>>, vector<1x2xf32>
    %319 = vector.broadcast %318 : vector<1x2xf32> to vector<2x2xf32>
    %320 = arith.addf %317, %319 : vector<2x2xf32>
    %c0_49 = arith.constant 0 : index
    %c0_50 = arith.constant 0 : index
    %321 = vector.load %arg8[%c0_49, %c0_50] : memref<2x2xf32, #tpu.memory_space<vmem>>, vector<2x2xf32>
    tpu.vector_store %arg8[%c0_49, %c0_50], %320 {strides = array<i32>} : memref<2x2xf32, #tpu.memory_space<vmem>>, vector<2x2xf32>,
    return
  }
}

</mosaic_0001>

<llo_original>
// kernel: tpu_custom_call.1
$region0: #{tpu_custom_call.1}
  #allocation0 [shape = 'u32[]', space=smem, size = 0x4, offset = 0x4, fixed_abs, tag = 'smem constant byte address 0x4 - core index']
  #allocation1 [shape = 'u32[72,128]{1,0:T(1,128)}', space=vmem, size = 0x9000, scoped, tag = 'internal scratch']
  %s0 = inlined_call_operand.hbm [shape: f32[16,10], index: 0, kind: input, shape index: {}]
  %s1 = inlined_call_operand.hbm [shape: f32[10,128], index: 1, kind: input, shape index: {}]
  %s2 = inlined_call_operand.vmem [shape: f32[32,128], index: 2, kind: input, shape index: {}]
  %s3 = inlined_call_operand.vmem [shape: f32[1,128], index: 3, kind: input, shape index: {}]
  %s4 = inlined_call_operand.hbm [shape: f32[64,128], index: 4, kind: input, shape index: {}]
  %s5 = inlined_call_operand.vmem [shape: f32[1,128], index: 5, kind: input, shape index: {}]
  %s6 = inlined_call_operand.vmem [shape: f32[32,2], index: 6, kind: input, shape index: {}]
  %s7 = inlined_call_operand.vmem [shape: f32[1,2], index: 7, kind: input, shape index: {}]
  %s8 = inlined_call_operand.hbm [shape: f32[2,2], index: 8, kind: output, shape index: {}]
  %s9 = sld [smem:[#allocation0]]
  $region54: #{tpu_custom_call.1} parent=0
    _
  %s11 = ssub.s32 1, %s9
  %s12 = scalar_select 0, %s11, %s9
  $region1: #{tpu_custom_call.1} parent=0
    #allocation2 [shape = 'u8[8192]{0}', space=vmem, size = 0x2000, scoped, tag = 'input window, operand 0, single buffered']
    #allocation3 [shape = 's32[1]{0}', space=sflag, size = 0x4, scoped, tag = 'scoped memory for tpu_custom_call.1']
    #allocation4 [shape = 's32[1]{0}', space=sflag, size = 0x4, scoped, tag = 'scoped memory for tpu_custom_call.1']
    #allocation5 [shape = 'u8[8192]{0}', space=vmem, size = 0x2000, scoped, tag = 'input window, operand 1, single buffered']
    #allocation6 [shape = 's32[1]{0}', space=sflag, size = 0x4, scoped, tag = 'scoped memory for tpu_custom_call.1']
    #allocation7 [shape = 'u8[32768]{0}', space=vmem, size = 0x8000, scoped, tag = 'input window, operand 4, single buffered']
    #allocation8 [shape = 'u8[1024]{0}', space=vmem, size = 0x400, scoped, tag = 'output window, operand 0, single buffered']
    %13 = vsyncpa [#allocation3], 0
    %14 = vsyncpa [#allocation6], 0
    %15 = vsyncpa [#allocation4], 0
    // Predicated region
    $region2: #{tpu_custom_call.1} parent=1 // pred_check
      _
    $region3: #{tpu_custom_call.1} parent=1 // pred_check_branch
      %17 = sbr.rel (0) target = $region5
    $region4: #{tpu_custom_call.1} parent=1 // pred_region
      %19 = vsyncadd [#allocation3], 0
      %s20 = sshll.u32 %s0, 4
      %s21 = int_to_ptr.hbm [resolvable:$true] %s20
      %s22 = sshll.u32 [#allocation2], 4
      %s23 = int_to_ptr.vmem [resolvable:$true] %s22
      %28 = dma.hbm_to_vmem [thread:$0]  %s21, 256, %s23, [#allocation3], 128, 128, 8
    $region5: #{tpu_custom_call.1} parent=1 // pred_fallthru
      _
    // Predicated region
    $region6: #{tpu_custom_call.1} parent=1 // pred_check
      _
    $region7: #{tpu_custom_call.1} parent=1 // pred_check_branch
      %30 = sbr.rel (0) target = $region9
    $region8: #{tpu_custom_call.1} parent=1 // pred_region
      %32 = vsyncadd [#allocation6], 0
      %s33 = sshll.u32 %s1, 4
      %s34 = int_to_ptr.hbm [resolvable:$true] %s33
      %s35 = sshll.u32 [#allocation5], 4
      %s36 = int_to_ptr.vmem [resolvable:$true] %s35
      %41 = dma.hbm_to_vmem [thread:$0]  %s34, 256, %s36, [#allocation6], 128, 128, 8
    $region9: #{tpu_custom_call.1} parent=1 // pred_fallthru
      _
    // Predicated region
    $region10: #{tpu_custom_call.1} parent=1 // pred_check
      _
    $region11: #{tpu_custom_call.1} parent=1 // pred_check_branch
      %43 = sbr.rel (0) target = $region13
    $region12: #{tpu_custom_call.1} parent=1 // pred_region
      _
    $region13: #{tpu_custom_call.1} parent=1 // pred_fallthru
      _
    // Predicated region
    $region14: #{tpu_custom_call.1} parent=1 // pred_check
      _
    $region15: #{tpu_custom_call.1} parent=1 // pred_check_branch
      %45 = sbr.rel (0) target = $region17
    $region16: #{tpu_custom_call.1} parent=1 // pred_region
      _
    $region17: #{tpu_custom_call.1} parent=1 // pred_fallthru
      _
    // Predicated region
    $region18: #{tpu_custom_call.1} parent=1 // pred_check
      _
    $region19: #{tpu_custom_call.1} parent=1 // pred_check_branch
      %47 = sbr.rel (0) target = $region21
    $region20: #{tpu_custom_call.1} parent=1 // pred_region
      %49 = vsyncadd [#allocation6], 0
      %s50 = sshll.u32 %s4, 4
      %s51 = int_to_ptr.hbm [resolvable:$true] %s50
      %s52 = sshll.u32 [#allocation7], 4
      %s53 = int_to_ptr.vmem [resolvable:$true] %s52
      %58 = dma.hbm_to_vmem [thread:$0]  %s51, 1024, %s53, [#allocation6], 128, 128, 8
    $region21: #{tpu_custom_call.1} parent=1 // pred_fallthru
      _
    // Predicated region
    $region22: #{tpu_custom_call.1} parent=1 // pred_check
      _
    $region23: #{tpu_custom_call.1} parent=1 // pred_check_branch
      %60 = sbr.rel (0) target = $region25
    $region24: #{tpu_custom_call.1} parent=1 // pred_region
      _
    $region25: #{tpu_custom_call.1} parent=1 // pred_fallthru
      _
    // Predicated region
    $region26: #{tpu_custom_call.1} parent=1 // pred_check
      _
    $region27: #{tpu_custom_call.1} parent=1 // pred_check_branch
      %62 = sbr.rel (0) target = $region29
    $region28: #{tpu_custom_call.1} parent=1 // pred_region
      _
    $region29: #{tpu_custom_call.1} parent=1 // pred_fallthru
      _
    // Predicated region
    $region30: #{tpu_custom_call.1} parent=1 // pred_check
      _
    $region31: #{tpu_custom_call.1} parent=1 // pred_check_branch
      %64 = sbr.rel (0) target = $region33
    $region32: #{tpu_custom_call.1} parent=1 // pred_region
      _
    $region33: #{tpu_custom_call.1} parent=1 // pred_fallthru
      _
    // Predicated region
    $region34: #{tpu_custom_call.1} parent=1 // pred_check
      _
    $region35: #{tpu_custom_call.1} parent=1 // pred_check_branch
      %66 = sbr.rel (0) target = $region37
    $region36: #{tpu_custom_call.1} parent=1 // pred_region
      %68 = dma.done [#allocation3], 256
    $region37: #{tpu_custom_call.1} parent=1 // pred_fallthru
      _
    // Predicated region
    $region38: #{tpu_custom_call.1} parent=1 // pred_check
      _
    $region39: #{tpu_custom_call.1} parent=1 // pred_check_branch
      %70 = sbr.rel (0) target = $region41
    $region40: #{tpu_custom_call.1} parent=1 // pred_region
      %72 = dma.done [#allocation6], 256
    $region41: #{tpu_custom_call.1} parent=1 // pred_fallthru
      _
    // Predicated region
    $region42: #{tpu_custom_call.1} parent=1 // pred_check
      _
    $region43: #{tpu_custom_call.1} parent=1 // pred_check_branch
      %74 = sbr.rel (0) target = $region45
    $region44: #{tpu_custom_call.1} parent=1 // pred_region
      %76 = dma.done [#allocation6], 1024
    $region45: #{tpu_custom_call.1} parent=1 // pred_fallthru
      _
    %v77 = vld [vmem:[%s2] sm:$0xff]
    %v78 = vld [vmem:[%s2 + $0x8] sm:$0xff]
    %v79 = vld [vmem:[%s2 + $0x10] sm:$0xff]
    %v80 = vld [vmem:[%s2 + $0x18] sm:$0xff]
    %v81 = vld [vmem:[#allocation7] sm:$0xff]
    %v82 = vld [vmem:[#allocation7 + $0x8] sm:$0xff]
    %v83 = vld [vmem:[#allocation7 + $0x10] sm:$0xff]
    %v84 = vld [vmem:[#allocation7 + $0x18] sm:$0xff]
    %v85 = vld [vmem:[#allocation7 + $0x20] sm:$0xff]
    %v86 = vld [vmem:[#allocation7 + $0x28] sm:$0xff]
    %v87 = vld [vmem:[#allocation7 + $0x30] sm:$0xff]
    %v88 = vld [vmem:[#allocation7 + $0x38] sm:$0xff]
    %v89 = vld [vmem:[%s5] sm:$0x1]
    %v91 = vperm.slane %v89, 0
    %v93 = vld [vmem:[#allocation2] sm:$0xff]
    %v94 = vld [vmem:[#allocation2 + $0x8] sm:$0xff]
    %v95 = vld [vmem:[#allocation5] sm:$0xff]
    %v96 = vld [vmem:[#allocation5 + $0x8] sm:$0x3]
    %v97 = vld [vmem:[%s3] sm:$0x1]
    %v99 = vperm.slane %v97, 0
    %vm101 = vcmask 80896
    %v103 = vsel %vm101, %v93, 0
    %v106 = vsel %vm101, %v94, 0
    %vm108 = vcmask 1041408
    %v110 = vsel %vm108, %v96, 0
    %112 = vmatpush.msra.mxu0 0.0
    %113 = vmatpush.msra.mxu0 0.0
    %114 = vmatpush.msra.mxu0 0.0
    %115 = vmatpush.msra.mxu0 0.0
    %116 = vmatpush.msra.mxu0 0.0
    %117 = vmatpush.msra.mxu0 0.0
    %118 = vmatpush.msra.mxu0 0.0
    %119 = vmatpush.msra.mxu0 0.0
    %120 = vmatpush.msra.mxu0 0.0
    %121 = vmatpush.msra.mxu0 0.0
    %122 = vmatpush.msra.mxu0 0.0
    %123 = vmatpush.msra.mxu0 0.0
    %124 = vmatpush.msra.mxu0 0.0
    %125 = vmatpush.msra.mxu0 0.0
    %126 = vmatpush.msra.mxu0 %v110
    %127 = vmatpush.msra.mxu0 %v95
    %128 = vmatmul.f32.gmra.mxu0 %v103
    %v129 = vpop.f32.mrf.mxu0
    %v130 = vadd.f32 %v99, %v129
    %131 = vmatmul.f32.gmra.mxu0 %v106
    %v132 = vpop.f32.mrf.mxu0
    %v133 = vadd.f32 %v99, %v132
    %134 = vdwg.mxu0
    %vm135 = vcmask 261120
    %v137 = vsel %vm135, 0.0, 0
    %139 = vmatpush.msra.mxu0 0.0
    %140 = vmatpush.msra.mxu0 0.0
    %141 = vmatpush.msra.mxu0 0.0
    %142 = vmatpush.msra.mxu0 0.0
    %143 = vmatpush.msra.mxu0 0.0
    %144 = vmatpush.msra.mxu0 0.0
    %145 = vmatpush.msra.mxu0 0.0
    %146 = vmatpush.msra.mxu0 0.0
    %147 = vmatpush.msra.mxu0 0.0
    %148 = vmatpush.msra.mxu0 0.0
    %149 = vmatpush.msra.mxu0 0.0
    %150 = vmatpush.msra.mxu0 0.0
    %151 = vmatpush.msra.mxu0 %v80
    %152 = vmatpush.msra.mxu0 %v79
    %153 = vmatpush.msra.mxu0 %v78
    %154 = vmatpush.msra.mxu0 %v77
    %155 = vmatmul.f32.gmra.mxu0 %v137
    %v156 = vpop.f32.mrf.mxu0
    %v157 = vadd.f32 0.0, %v156
    %158 = vdwg.mxu0
    %v159 = vadd.f32 %v130, %v157
    %v160 = vxor.u32 %v159, 2147483648
    %v161 = vmul.f32 %v160, 1.442695
    %v162 = vpow.pop %v161
    %v163 = vadd.f32 %v162, 1.0
    %v164 = vrcp.pop %v163
    %v165 = vmul.f32 %v163, %v164
    %v166 = vsub.f32 1.0, %v165
    %v167 = vmul.f32 %v164, %v166
    %v168 = vadd.f32 %v164, %v167
    %vm169 = vweird.f32 %v163
    %vm170 = vweird.f32 %v164
    %vm171 = vmor %vm169, %vm170
    %v172 = vsel %vm171, %v164, %v168
    %v173 = vand.u32 2147483647, %v163
    %vm174 = vcmp.eq.f32.partialorder %v173, 8.507059e+37
    %v175 = vand.u32 %v163, 2147483648
    %v176 = vor.u32 1.1754944e-38, %v175
    %v177 = vsel %vm174, %v176, %v172
    %v178 = vmul.f32 1.0, %v177
    %v179 = vtanh.pop %v159
    %v180 = vmul.f32 %v178, 0.0
    %182 = vrot.lane.b32.xlu0 %v179, 32
    %v183 = vpop.permute.xlu0 %182
    %v185 = vmul.f32 %v178, %v183
    %187 = vrot.lane.b32.xlu0 %v185, 32
    %v188 = vpop.permute.xlu0 %187
    %v190 = vadd.f32 %v180, %v188
    %v191 = vtanh.pop %v190
    %193 = vrot.lane.b32.xlu0 %v191, 32
    %v194 = vpop.permute.xlu0 %193
    %v196 = vmul.f32 %v178, %v194
    %198 = vrot.lane.b32.xlu0 %v196, 64
    %v199 = vpop.permute.xlu0 %198
    %v201 = vsel %vm135, %v199, 0.0
    %vm202 = vcmask 523264
    %v204 = vsel %vm202, %v201, 0
    %206 = vmatpush.msra.mxu0 0.0
    %207 = vmatpush.msra.mxu0 0.0
    %208 = vmatpush.msra.mxu0 0.0
    %209 = vmatpush.msra.mxu0 0.0
    %210 = vmatpush.msra.mxu0 0.0
    %211 = vmatpush.msra.mxu0 0.0
    %212 = vmatpush.msra.mxu0 0.0
    %213 = vmatpush.msra.mxu0 0.0
    %214 = vmatpush.msra.mxu0 %v88
    %215 = vmatpush.msra.mxu0 %v87
    %216 = vmatpush.msra.mxu0 %v86
    %217 = vmatpush.msra.mxu0 %v85
    %218 = vmatpush.msra.mxu0 %v84
    %219 = vmatpush.msra.mxu0 %v83
    %220 = vmatpush.msra.mxu0 %v82
    %221 = vmatpush.msra.mxu0 %v81
    %222 = vmatmul.f32.gmra.mxu0 %v204
    %v223 = vpop.f32.mrf.mxu0
    %v224 = vadd.f32 %v91, %v223
    %225 = vdwg.mxu0
    %v226 = vxor.u32 %v224, 2147483648
    %v227 = vmul.f32 %v226, 1.442695
    %v228 = vpow.pop %v227
    %v229 = vadd.f32 %v228, 1.0
    %v230 = vrcp.pop %v229
    %v231 = vmul.f32 %v229, %v230
    %v232 = vsub.f32 1.0, %v231
    %v233 = vmul.f32 %v230, %v232
    %v234 = vadd.f32 %v230, %v233
    %vm235 = vweird.f32 %v229
    %vm236 = vweird.f32 %v230
    %vm237 = vmor %vm235, %vm236
    %v238 = vsel %vm237, %v230, %v234
    %v239 = vand.u32 2147483647, %v229
    %vm240 = vcmp.eq.f32.partialorder %v239, 8.507059e+37
    %v241 = vand.u32 %v229, 2147483648
    %v242 = vor.u32 1.1754944e-38, %v241
    %v243 = vsel %vm240, %v242, %v238
    %v244 = vmul.f32 1.0, %v243
    %v245 = vtanh.pop %v224
    %v246 = vmul.f32 %v244, 0.0
    %248 = vrot.lane.b32.xlu0 %v245, 32
    %v249 = vpop.permute.xlu0 %248
    %v251 = vmul.f32 %v244, %v249
    %253 = vrot.lane.b32.xlu0 %v251, 32
    %v254 = vpop.permute.xlu0 %253
    %v256 = vadd.f32 %v246, %v254
    %v257 = vtanh.pop %v256
    %259 = vrot.lane.b32.xlu0 %v257, 32
    %v260 = vpop.permute.xlu0 %259
    %v262 = vmul.f32 %v244, %v260
    %v263 = vsel %vm135, %v199, 0
    %265 = vmatpush.msra.mxu0 0.0
    %266 = vmatpush.msra.mxu0 0.0
    %267 = vmatpush.msra.mxu0 0.0
    %268 = vmatpush.msra.mxu0 0.0
    %269 = vmatpush.msra.mxu0 0.0
    %270 = vmatpush.msra.mxu0 0.0
    %271 = vmatpush.msra.mxu0 0.0
    %272 = vmatpush.msra.mxu0 0.0
    %273 = vmatpush.msra.mxu0 0.0
    %274 = vmatpush.msra.mxu0 0.0
    %275 = vmatpush.msra.mxu0 0.0
    %276 = vmatpush.msra.mxu0 0.0
    %277 = vmatpush.msra.mxu0 %v80
    %278 = vmatpush.msra.mxu0 %v79
    %279 = vmatpush.msra.mxu0 %v78
    %280 = vmatpush.msra.mxu0 %v77
    %281 = vmatmul.f32.gmra.mxu0 %v263
    %v282 = vpop.f32.mrf.mxu0
    %v283 = vadd.f32 0.0, %v282
    %284 = vdwg.mxu0
    %v286 = vrot.slane %v283, 6
    %v288 = vadd.f32 %v130, %v286
    %v289 = vxor.u32 %v288, 2147483648
    %v290 = vmul.f32 %v289, 1.442695
    %v291 = vpow.pop %v290
    %v292 = vadd.f32 %v291, 1.0
    %v293 = vrcp.pop %v292
    %v294 = vmul.f32 %v292, %v293
    %v295 = vsub.f32 1.0, %v294
    %v296 = vmul.f32 %v293, %v295
    %v297 = vadd.f32 %v293, %v296
    %vm298 = vweird.f32 %v292
    %vm299 = vweird.f32 %v293
    %vm300 = vmor %vm298, %vm299
    %v301 = vsel %vm300, %v293, %v297
    %v302 = vand.u32 2147483647, %v292
    %vm303 = vcmp.eq.f32.partialorder %v302, 8.507059e+37
    %v304 = vand.u32 %v292, 2147483648
    %v305 = vor.u32 1.1754944e-38, %v304
    %v306 = vsel %vm303, %v305, %v301
    %v307 = vmul.f32 1.0, %v306
    %v308 = vtanh.pop %v288
    %v310 = vrot.slane %v190, 6
    %v312 = vmul.f32 %v307, %v310
    %314 = vrot.lane.b32.xlu0 %v308, 32
    %v315 = vpop.permute.xlu0 %314
    %v317 = vmul.f32 %v307, %v315
    %319 = vrot.lane.b32.xlu0 %v317, 32
    %v320 = vpop.permute.xlu0 %319
    %v322 = vadd.f32 %v312, %v320
    %v323 = vtanh.pop %v322
    %325 = vrot.lane.b32.xlu0 %v323, 32
    %v326 = vpop.permute.xlu0 %325
    %v328 = vmul.f32 %v307, %v326
    %330 = vrot.lane.b32.xlu0 %v328, 64
    %v331 = vpop.permute.xlu0 %330
    %v334 = vrot.slane %v262, 6
    %335 = vrot.lane.b32.xlu0 %v334, 96
    %v336 = vpop.permute.xlu0 %335
    %v338 = vsel %vm135, %v331, %v336
    %v340 = vrot.slane %v338, 2
    %v341 = vsel %vm202, %v340, 0
    %343 = vmatpush.msra.mxu0 0.0
    %344 = vmatpush.msra.mxu0 0.0
    %345 = vmatpush.msra.mxu0 0.0
    %346 = vmatpush.msra.mxu0 0.0
    %347 = vmatpush.msra.mxu0 0.0
    %348 = vmatpush.msra.mxu0 0.0
    %349 = vmatpush.msra.mxu0 0.0
    %350 = vmatpush.msra.mxu0 0.0
    %351 = vmatpush.msra.mxu0 %v88
    %352 = vmatpush.msra.mxu0 %v87
    %353 = vmatpush.msra.mxu0 %v86
    %354 = vmatpush.msra.mxu0 %v85
    %355 = vmatpush.msra.mxu0 %v84
    %356 = vmatpush.msra.mxu0 %v83
    %357 = vmatpush.msra.mxu0 %v82
    %358 = vmatpush.msra.mxu0 %v81
    %359 = vmatmul.f32.gmra.mxu0 %v341
    %v360 = vpop.f32.mrf.mxu0
    %v361 = vadd.f32 %v91, %v360
    %362 = vdwg.mxu0
    %v363 = vxor.u32 %v361, 2147483648
    %v364 = vmul.f32 %v363, 1.442695
    %v365 = vpow.pop %v364
    %v366 = vadd.f32 %v365, 1.0
    %v367 = vrcp.pop %v366
    %v368 = vmul.f32 %v366, %v367
    %v369 = vsub.f32 1.0, %v368
    %v370 = vmul.f32 %v367, %v369
    %v371 = vadd.f32 %v367, %v370
    %vm372 = vweird.f32 %v366
    %vm373 = vweird.f32 %v367
    %vm374 = vmor %vm372, %vm373
    %v375 = vsel %vm374, %v367, %v371
    %v376 = vand.u32 2147483647, %v366
    %vm377 = vcmp.eq.f32.partialorder %v376, 8.507059e+37
    %v378 = vand.u32 %v366, 2147483648
    %v379 = vor.u32 1.1754944e-38, %v378
    %v380 = vsel %vm377, %v379, %v375
    %v381 = vmul.f32 1.0, %v380
    %v382 = vtanh.pop %v361
    %v383 = vmul.f32 %v381, %v256
    %385 = vrot.lane.b32.xlu0 %v382, 32
    %v386 = vpop.permute.xlu0 %385
    %v388 = vmul.f32 %v381, %v386
    %390 = vrot.lane.b32.xlu0 %v388, 32
    %v391 = vpop.permute.xlu0 %390
    %v393 = vadd.f32 %v383, %v391
    %v394 = vtanh.pop %v393
    %396 = vrot.lane.b32.xlu0 %v394, 32
    %v397 = vpop.permute.xlu0 %396
    %v399 = vmul.f32 %v381, %v397
    %v400 = vrot.slane %v328, 2
    %401 = vrot.lane.b32.xlu0 %v400, 64
    %v402 = vpop.permute.xlu0 %401
    %v403 = vsel %vm135, %v402, 0
    %405 = vmatpush.msra.mxu0 0.0
    %406 = vmatpush.msra.mxu0 0.0
    %407 = vmatpush.msra.mxu0 0.0
    %408 = vmatpush.msra.mxu0 0.0
    %409 = vmatpush.msra.mxu0 0.0
    %410 = vmatpush.msra.mxu0 0.0
    %411 = vmatpush.msra.mxu0 0.0
    %412 = vmatpush.msra.mxu0 0.0
    %413 = vmatpush.msra.mxu0 0.0
    %414 = vmatpush.msra.mxu0 0.0
    %415 = vmatpush.msra.mxu0 0.0
    %416 = vmatpush.msra.mxu0 0.0
    %417 = vmatpush.msra.mxu0 %v80
    %418 = vmatpush.msra.mxu0 %v79
    %419 = vmatpush.msra.mxu0 %v78
    %420 = vmatpush.msra.mxu0 %v77
    %421 = vmatmul.f32.gmra.mxu0 %v403
    %v422 = vpop.f32.mrf.mxu0
    %v423 = vadd.f32 0.0, %v422
    %424 = vdwg.mxu0
    %v426 = vrot.slane %v423, 4
    %v428 = vadd.f32 %v130, %v426
    %v429 = vxor.u32 %v428, 2147483648
    %v430 = vmul.f32 %v429, 1.442695
    %v431 = vpow.pop %v430
    %v432 = vadd.f32 %v431, 1.0
    %v433 = vrcp.pop %v432
    %v434 = vmul.f32 %v432, %v433
    %v435 = vsub.f32 1.0, %v434
    %v436 = vmul.f32 %v433, %v435
    %v437 = vadd.f32 %v433, %v436
    %vm438 = vweird.f32 %v432
    %vm439 = vweird.f32 %v433
    %vm440 = vmor %vm438, %vm439
    %v441 = vsel %vm440, %v433, %v437
    %v442 = vand.u32 2147483647, %v432
    %vm443 = vcmp.eq.f32.partialorder %v442, 8.507059e+37
    %v444 = vand.u32 %v432, 2147483648
    %v445 = vor.u32 1.1754944e-38, %v444
    %v446 = vsel %vm443, %v445, %v441
    %v447 = vmul.f32 1.0, %v446
    %v448 = vtanh.pop %v428
    %v450 = vrot.slane %v322, 6
    %v452 = vmul.f32 %v447, %v450
    %454 = vrot.lane.b32.xlu0 %v448, 32
    %v455 = vpop.permute.xlu0 %454
    %v457 = vmul.f32 %v447, %v455
    %459 = vrot.lane.b32.xlu0 %v457, 32
    %v460 = vpop.permute.xlu0 %459
    %v462 = vadd.f32 %v452, %v460
    %v463 = vtanh.pop %v462
    %465 = vrot.lane.b32.xlu0 %v463, 32
    %v466 = vpop.permute.xlu0 %465
    %v468 = vmul.f32 %v447, %v466
    %470 = vrot.lane.b32.xlu0 %v468, 64
    %v471 = vpop.permute.xlu0 %470
    %v474 = vrot.slane %v399, 4
    %475 = vrot.lane.b32.xlu0 %v474, 96
    %v476 = vpop.permute.xlu0 %475
    %v478 = vsel %vm135, %v471, %v476
    %v480 = vrot.slane %v478, 4
    %v481 = vsel %vm202, %v480, 0
    %483 = vmatpush.msra.mxu0 0.0
    %484 = vmatpush.msra.mxu0 0.0
    %485 = vmatpush.msra.mxu0 0.0
    %486 = vmatpush.msra.mxu0 0.0
    %487 = vmatpush.msra.mxu0 0.0
    %488 = vmatpush.msra.mxu0 0.0
    %489 = vmatpush.msra.mxu0 0.0
    %490 = vmatpush.msra.mxu0 0.0
    %491 = vmatpush.msra.mxu0 %v88
    %492 = vmatpush.msra.mxu0 %v87
    %493 = vmatpush.msra.mxu0 %v86
    %494 = vmatpush.msra.mxu0 %v85
    %495 = vmatpush.msra.mxu0 %v84
    %496 = vmatpush.msra.mxu0 %v83
    %497 = vmatpush.msra.mxu0 %v82
    %498 = vmatpush.msra.mxu0 %v81
    %499 = vmatmul.f32.gmra.mxu0 %v481
    %v500 = vpop.f32.mrf.mxu0
    %v501 = vadd.f32 %v91, %v500
    %502 = vdwg.mxu0
    %v503 = vxor.u32 %v501, 2147483648
    %v504 = vmul.f32 %v503, 1.442695
    %v505 = vpow.pop %v504
    %v506 = vadd.f32 %v505, 1.0
    %v507 = vrcp.pop %v506
    %v508 = vmul.f32 %v506, %v507
    %v509 = vsub.f32 1.0, %v508
    %v510 = vmul.f32 %v507, %v509
    %v511 = vadd.f32 %v507, %v510
    %vm512 = vweird.f32 %v506
    %vm513 = vweird.f32 %v507
    %vm514 = vmor %vm512, %vm513
    %v515 = vsel %vm514, %v507, %v511
    %v516 = vand.u32 2147483647, %v506
    %vm517 = vcmp.eq.f32.partialorder %v516, 8.507059e+37
    %v518 = vand.u32 %v506, 2147483648
    %v519 = vor.u32 1.1754944e-38, %v518
    %v520 = vsel %vm517, %v519, %v515
    %v521 = vmul.f32 1.0, %v520
    %v522 = vtanh.pop %v501
    %v523 = vmul.f32 %v521, %v393
    %525 = vrot.lane.b32.xlu0 %v522, 32
    %v526 = vpop.permute.xlu0 %525
    %v528 = vmul.f32 %v521, %v526
    %530 = vrot.lane.b32.xlu0 %v528, 32
    %v531 = vpop.permute.xlu0 %530
    %v533 = vadd.f32 %v523, %v531
    %v534 = vtanh.pop %v533
    %536 = vrot.lane.b32.xlu0 %v534, 32
    %v537 = vpop.permute.xlu0 %536
    %v539 = vmul.f32 %v521, %v537
    %v540 = vrot.slane %v468, 4
    %541 = vrot.lane.b32.xlu0 %v540, 64
    %v542 = vpop.permute.xlu0 %541
    %v543 = vsel %vm135, %v542, 0
    %545 = vmatpush.msra.mxu0 0.0
    %546 = vmatpush.msra.mxu0 0.0
    %547 = vmatpush.msra.mxu0 0.0
    %548 = vmatpush.msra.mxu0 0.0
    %549 = vmatpush.msra.mxu0 0.0
    %550 = vmatpush.msra.mxu0 0.0
    %551 = vmatpush.msra.mxu0 0.0
    %552 = vmatpush.msra.mxu0 0.0
    %553 = vmatpush.msra.mxu0 0.0
    %554 = vmatpush.msra.mxu0 0.0
    %555 = vmatpush.msra.mxu0 0.0
    %556 = vmatpush.msra.mxu0 0.0
    %557 = vmatpush.msra.mxu0 %v80
    %558 = vmatpush.msra.mxu0 %v79
    %559 = vmatpush.msra.mxu0 %v78
    %560 = vmatpush.msra.mxu0 %v77
    %561 = vmatmul.f32.gmra.mxu0 %v543
    %v562 = vpop.f32.mrf.mxu0
    %v563 = vadd.f32 0.0, %v562
    %564 = vdwg.mxu0
    %v566 = vrot.slane %v563, 2
    %v568 = vadd.f32 %v130, %v566
    %v569 = vxor.u32 %v568, 2147483648
    %v570 = vmul.f32 %v569, 1.442695
    %v571 = vpow.pop %v570
    %v572 = vadd.f32 %v571, 1.0
    %v573 = vrcp.pop %v572
    %v574 = vmul.f32 %v572, %v573
    %v575 = vsub.f32 1.0, %v574
    %v576 = vmul.f32 %v573, %v575
    %v577 = vadd.f32 %v573, %v576
    %vm578 = vweird.f32 %v572
    %vm579 = vweird.f32 %v573
    %vm580 = vmor %vm578, %vm579
    %v581 = vsel %vm580, %v573, %v577
    %v582 = vand.u32 2147483647, %v572
    %vm583 = vcmp.eq.f32.partialorder %v582, 8.507059e+37
    %v584 = vand.u32 %v572, 2147483648
    %v585 = vor.u32 1.1754944e-38, %v584
    %v586 = vsel %vm583, %v585, %v581
    %v587 = vmul.f32 1.0, %v586
    %v588 = vtanh.pop %v568
    %v590 = vrot.slane %v462, 6
    %v592 = vmul.f32 %v587, %v590
    %594 = vrot.lane.b32.xlu0 %v588, 32
    %v595 = vpop.permute.xlu0 %594
    %v597 = vmul.f32 %v587, %v595
    %599 = vrot.lane.b32.xlu0 %v597, 32
    %v600 = vpop.permute.xlu0 %599
    %v602 = vadd.f32 %v592, %v600
    %v603 = vtanh.pop %v602
    %605 = vrot.lane.b32.xlu0 %v603, 32
    %v606 = vpop.permute.xlu0 %605
    %v608 = vmul.f32 %v587, %v606
    %610 = vrot.lane.b32.xlu0 %v608, 64
    %v611 = vpop.permute.xlu0 %610
    %v614 = vrot.slane %v539, 2
    %615 = vrot.lane.b32.xlu0 %v614, 96
    %v616 = vpop.permute.xlu0 %615
    %v618 = vsel %vm135, %v611, %v616
    %v620 = vrot.slane %v618, 6
    %v621 = vsel %vm202, %v620, 0
    %623 = vmatpush.msra.mxu0 0.0
    %624 = vmatpush.msra.mxu0 0.0
    %625 = vmatpush.msra.mxu0 0.0
    %626 = vmatpush.msra.mxu0 0.0
    %627 = vmatpush.msra.mxu0 0.0
    %628 = vmatpush.msra.mxu0 0.0
    %629 = vmatpush.msra.mxu0 0.0
    %630 = vmatpush.msra.mxu0 0.0
    %631 = vmatpush.msra.mxu0 %v88
    %632 = vmatpush.msra.mxu0 %v87
    %633 = vmatpush.msra.mxu0 %v86
    %634 = vmatpush.msra.mxu0 %v85
    %635 = vmatpush.msra.mxu0 %v84
    %636 = vmatpush.msra.mxu0 %v83
    %637 = vmatpush.msra.mxu0 %v82
    %638 = vmatpush.msra.mxu0 %v81
    %639 = vmatmul.f32.gmra.mxu0 %v621
    %v640 = vpop.f32.mrf.mxu0
    %v641 = vadd.f32 %v91, %v640
    %642 = vdwg.mxu0
    %v643 = vxor.u32 %v641, 2147483648
    %v644 = vmul.f32 %v643, 1.442695
    %v645 = vpow.pop %v644
    %v646 = vadd.f32 %v645, 1.0
    %v647 = vrcp.pop %v646
    %v648 = vmul.f32 %v646, %v647
    %v649 = vsub.f32 1.0, %v648
    %v650 = vmul.f32 %v647, %v649
    %v651 = vadd.f32 %v647, %v650
    %vm652 = vweird.f32 %v646
    %vm653 = vweird.f32 %v647
    %vm654 = vmor %vm652, %vm653
    %v655 = vsel %vm654, %v647, %v651
    %v656 = vand.u32 2147483647, %v646
    %vm657 = vcmp.eq.f32.partialorder %v656, 8.507059e+37
    %v658 = vand.u32 %v646, 2147483648
    %v659 = vor.u32 1.1754944e-38, %v658
    %v660 = vsel %vm657, %v659, %v655
    %v661 = vmul.f32 1.0, %v660
    %v662 = vtanh.pop %v641
    %v663 = vmul.f32 %v661, %v533
    %665 = vrot.lane.b32.xlu0 %v662, 32
    %v666 = vpop.permute.xlu0 %665
    %v668 = vmul.f32 %v661, %v666
    %670 = vrot.lane.b32.xlu0 %v668, 32
    %v671 = vpop.permute.xlu0 %670
    %v673 = vadd.f32 %v663, %v671
    %v674 = vtanh.pop %v673
    %676 = vrot.lane.b32.xlu0 %v674, 32
    %v677 = vpop.permute.xlu0 %676
    %v679 = vmul.f32 %v661, %v677
    %v680 = vrot.slane %v608, 6
    %681 = vrot.lane.b32.xlu0 %v680, 64
    %v682 = vpop.permute.xlu0 %681
    %v683 = vsel %vm135, %v682, 0
    %685 = vmatpush.msra.mxu0 0.0
    %686 = vmatpush.msra.mxu0 0.0
    %687 = vmatpush.msra.mxu0 0.0
    %688 = vmatpush.msra.mxu0 0.0
    %689 = vmatpush.msra.mxu0 0.0
    %690 = vmatpush.msra.mxu0 0.0
    %691 = vmatpush.msra.mxu0 0.0
    %692 = vmatpush.msra.mxu0 0.0
    %693 = vmatpush.msra.mxu0 0.0
    %694 = vmatpush.msra.mxu0 0.0
    %695 = vmatpush.msra.mxu0 0.0
    %696 = vmatpush.msra.mxu0 0.0
    %697 = vmatpush.msra.mxu0 %v80
    %698 = vmatpush.msra.mxu0 %v79
    %699 = vmatpush.msra.mxu0 %v78
    %700 = vmatpush.msra.mxu0 %v77
    %701 = vmatmul.f32.gmra.mxu0 %v683
    %v702 = vpop.f32.mrf.mxu0
    %v703 = vadd.f32 0.0, %v702
    %704 = vdwg.mxu0
    %v705 = vadd.f32 %v133, %v703
    %v706 = vxor.u32 %v705, 2147483648
    %v707 = vmul.f32 %v706, 1.442695
    %v708 = vpow.pop %v707
    %v709 = vadd.f32 %v708, 1.0
    %v710 = vrcp.pop %v709
    %v711 = vmul.f32 %v709, %v710
    %v712 = vsub.f32 1.0, %v711
    %v713 = vmul.f32 %v710, %v712
    %v714 = vadd.f32 %v710, %v713
    %vm715 = vweird.f32 %v709
    %vm716 = vweird.f32 %v710
    %vm717 = vmor %vm715, %vm716
    %v718 = vsel %vm717, %v710, %v714
    %v719 = vand.u32 2147483647, %v709
    %vm720 = vcmp.eq.f32.partialorder %v719, 8.507059e+37
    %v721 = vand.u32 %v709, 2147483648
    %v722 = vor.u32 1.1754944e-38, %v721
    %v723 = vsel %vm720, %v722, %v718
    %v724 = vmul.f32 1.0, %v723
    %v725 = vtanh.pop %v705
    %v727 = vrot.slane %v602, 6
    %v729 = vmul.f32 %v724, %v727
    %731 = vrot.lane.b32.xlu0 %v725, 32
    %v732 = vpop.permute.xlu0 %731
    %v734 = vmul.f32 %v724, %v732
    %736 = vrot.lane.b32.xlu0 %v734, 32
    %v737 = vpop.permute.xlu0 %736
    %v739 = vadd.f32 %v729, %v737
    %v740 = vtanh.pop %v739
    %742 = vrot.lane.b32.xlu0 %v740, 32
    %v743 = vpop.permute.xlu0 %742
    %v745 = vmul.f32 %v724, %v743
    %747 = vrot.lane.b32.xlu0 %v745, 64
    %v748 = vpop.permute.xlu0 %747
    %751 = vrot.lane.b32.xlu0 %v679, 96
    %v752 = vpop.permute.xlu0 %751
    %v754 = vsel %vm135, %v748, %v752
    %v756 = vsel %vm202, %v754, 0
    %758 = vmatpush.msra.mxu0 0.0
    %759 = vmatpush.msra.mxu0 0.0
    %760 = vmatpush.msra.mxu0 0.0
    %761 = vmatpush.msra.mxu0 0.0
    %762 = vmatpush.msra.mxu0 0.0
    %763 = vmatpush.msra.mxu0 0.0
    %764 = vmatpush.msra.mxu0 0.0
    %765 = vmatpush.msra.mxu0 0.0
    %766 = vmatpush.msra.mxu0 %v88
    %767 = vmatpush.msra.mxu0 %v87
    %768 = vmatpush.msra.mxu0 %v86
    %769 = vmatpush.msra.mxu0 %v85
    %770 = vmatpush.msra.mxu0 %v84
    %771 = vmatpush.msra.mxu0 %v83
    %772 = vmatpush.msra.mxu0 %v82
    %773 = vmatpush.msra.mxu0 %v81
    %774 = vmatmul.f32.gmra.mxu0 %v756
    %v775 = vpop.f32.mrf.mxu0
    %v776 = vadd.f32 %v91, %v775
    %777 = vdwg.mxu0
    %v778 = vxor.u32 %v776, 2147483648
    %v779 = vmul.f32 %v778, 1.442695
    %v780 = vpow.pop %v779
    %v781 = vadd.f32 %v780, 1.0
    %v782 = vrcp.pop %v781
    %v783 = vmul.f32 %v781, %v782
    %v784 = vsub.f32 1.0, %v783
    %v785 = vmul.f32 %v782, %v784
    %v786 = vadd.f32 %v782, %v785
    %vm787 = vweird.f32 %v781
    %vm788 = vweird.f32 %v782
    %vm789 = vmor %vm787, %vm788
    %v790 = vsel %vm789, %v782, %v786
    %v791 = vand.u32 2147483647, %v781
    %vm792 = vcmp.eq.f32.partialorder %v791, 8.507059e+37
    %v793 = vand.u32 %v781, 2147483648
    %v794 = vor.u32 1.1754944e-38, %v793
    %v795 = vsel %vm792, %v794, %v790
    %v796 = vmul.f32 1.0, %v795
    %v797 = vtanh.pop %v776
    %v798 = vmul.f32 %v796, %v673
    %800 = vrot.lane.b32.xlu0 %v797, 32
    %v801 = vpop.permute.xlu0 %800
    %v803 = vmul.f32 %v796, %v801
    %805 = vrot.lane.b32.xlu0 %v803, 32
    %v806 = vpop.permute.xlu0 %805
    %v808 = vadd.f32 %v798, %v806
    %v809 = vtanh.pop %v808
    %811 = vrot.lane.b32.xlu0 %v809, 32
    %v812 = vpop.permute.xlu0 %811
    %v814 = vmul.f32 %v796, %v812
    %v815 = vsel %vm135, %v748, 0
    %817 = vmatpush.msra.mxu0 0.0
    %818 = vmatpush.msra.mxu0 0.0
    %819 = vmatpush.msra.mxu0 0.0
    %820 = vmatpush.msra.mxu0 0.0
    %821 = vmatpush.msra.mxu0 0.0
    %822 = vmatpush.msra.mxu0 0.0
    %823 = vmatpush.msra.mxu0 0.0
    %824 = vmatpush.msra.mxu0 0.0
    %825 = vmatpush.msra.mxu0 0.0
    %826 = vmatpush.msra.mxu0 0.0
    %827 = vmatpush.msra.mxu0 0.0
    %828 = vmatpush.msra.mxu0 0.0
    %829 = vmatpush.msra.mxu0 %v80
    %830 = vmatpush.msra.mxu0 %v79
    %831 = vmatpush.msra.mxu0 %v78
    %832 = vmatpush.msra.mxu0 %v77
    %833 = vmatmul.f32.gmra.mxu0 %v815
    %v834 = vpop.f32.mrf.mxu0
    %v835 = vadd.f32 0.0, %v834
    %836 = vdwg.mxu0
    %v838 = vrot.slane %v835, 6
    %v840 = vadd.f32 %v133, %v838
    %v841 = vxor.u32 %v840, 2147483648
    %v842 = vmul.f32 %v841, 1.442695
    %v843 = vpow.pop %v842
    %v844 = vadd.f32 %v843, 1.0
    %v845 = vrcp.pop %v844
    %v846 = vmul.f32 %v844, %v845
    %v847 = vsub.f32 1.0, %v846
    %v848 = vmul.f32 %v845, %v847
    %v849 = vadd.f32 %v845, %v848
    %vm850 = vweird.f32 %v844
    %vm851 = vweird.f32 %v845
    %vm852 = vmor %vm850, %vm851
    %v853 = vsel %vm852, %v845, %v849
    %v854 = vand.u32 2147483647, %v844
    %vm855 = vcmp.eq.f32.partialorder %v854, 8.507059e+37
    %v856 = vand.u32 %v844, 2147483648
    %v857 = vor.u32 1.1754944e-38, %v856
    %v858 = vsel %vm855, %v857, %v853
    %v859 = vmul.f32 1.0, %v858
    %v860 = vtanh.pop %v840
    %v862 = vrot.slane %v739, 6
    %v864 = vmul.f32 %v859, %v862
    %866 = vrot.lane.b32.xlu0 %v860, 32
    %v867 = vpop.permute.xlu0 %866
    %v869 = vmul.f32 %v859, %v867
    %871 = vrot.lane.b32.xlu0 %v869, 32
    %v872 = vpop.permute.xlu0 %871
    %v874 = vadd.f32 %v864, %v872
    %v875 = vtanh.pop %v874
    %877 = vrot.lane.b32.xlu0 %v875, 32
    %v878 = vpop.permute.xlu0 %877
    %v880 = vmul.f32 %v859, %v878
    %882 = vrot.lane.b32.xlu0 %v880, 64
    %v883 = vpop.permute.xlu0 %882
    %v886 = vrot.slane %v814, 6
    %887 = vrot.lane.b32.xlu0 %v886, 96
    %v888 = vpop.permute.xlu0 %887
    %v890 = vsel %vm135, %v883, %v888
    %v892 = vrot.slane %v890, 2
    %v893 = vsel %vm202, %v892, 0
    %895 = vmatpush.msra.mxu0 0.0
    %896 = vmatpush.msra.mxu0 0.0
    %897 = vmatpush.msra.mxu0 0.0
    %898 = vmatpush.msra.mxu0 0.0
    %899 = vmatpush.msra.mxu0 0.0
    %900 = vmatpush.msra.mxu0 0.0
    %901 = vmatpush.msra.mxu0 0.0
    %902 = vmatpush.msra.mxu0 0.0
    %903 = vmatpush.msra.mxu0 %v88
    %904 = vmatpush.msra.mxu0 %v87
    %905 = vmatpush.msra.mxu0 %v86
    %906 = vmatpush.msra.mxu0 %v85
    %907 = vmatpush.msra.mxu0 %v84
    %908 = vmatpush.msra.mxu0 %v83
    %909 = vmatpush.msra.mxu0 %v82
    %910 = vmatpush.msra.mxu0 %v81
    %911 = vmatmul.f32.gmra.mxu0 %v893
    %v912 = vpop.f32.mrf.mxu0
    %v913 = vadd.f32 %v91, %v912
    %914 = vdwg.mxu0
    %v915 = vxor.u32 %v913, 2147483648
    %v916 = vmul.f32 %v915, 1.442695
    %v917 = vpow.pop %v916
    %v918 = vadd.f32 %v917, 1.0
    %v919 = vrcp.pop %v918
    %v920 = vmul.f32 %v918, %v919
    %v921 = vsub.f32 1.0, %v920
    %v922 = vmul.f32 %v919, %v921
    %v923 = vadd.f32 %v919, %v922
    %vm924 = vweird.f32 %v918
    %vm925 = vweird.f32 %v919
    %vm926 = vmor %vm924, %vm925
    %v927 = vsel %vm926, %v919, %v923
    %v928 = vand.u32 2147483647, %v918
    %vm929 = vcmp.eq.f32.partialorder %v928, 8.507059e+37
    %v930 = vand.u32 %v918, 2147483648
    %v931 = vor.u32 1.1754944e-38, %v930
    %v932 = vsel %vm929, %v931, %v927
    %v933 = vmul.f32 1.0, %v932
    %v934 = vtanh.pop %v913
    %v935 = vmul.f32 %v933, %v808
    %937 = vrot.lane.b32.xlu0 %v934, 32
    %v938 = vpop.permute.xlu0 %937
    %v940 = vmul.f32 %v933, %v938
    %942 = vrot.lane.b32.xlu0 %v940, 32
    %v943 = vpop.permute.xlu0 %942
    %v945 = vadd.f32 %v935, %v943
    %v946 = vtanh.pop %v945
    %948 = vrot.lane.b32.xlu0 %v946, 32
    %v949 = vpop.permute.xlu0 %948
    %v951 = vmul.f32 %v933, %v949
    %v952 = vrot.slane %v880, 2
    %953 = vrot.lane.b32.xlu0 %v952, 64
    %v954 = vpop.permute.xlu0 %953
    %v955 = vsel %vm135, %v954, 0
    %957 = vmatpush.msra.mxu0 0.0
    %958 = vmatpush.msra.mxu0 0.0
    %959 = vmatpush.msra.mxu0 0.0
    %960 = vmatpush.msra.mxu0 0.0
    %961 = vmatpush.msra.mxu0 0.0
    %962 = vmatpush.msra.mxu0 0.0
    %963 = vmatpush.msra.mxu0 0.0
    %964 = vmatpush.msra.mxu0 0.0
    %965 = vmatpush.msra.mxu0 0.0
    %966 = vmatpush.msra.mxu0 0.0
    %967 = vmatpush.msra.mxu0 0.0
    %968 = vmatpush.msra.mxu0 0.0
    %969 = vmatpush.msra.mxu0 %v80
    %970 = vmatpush.msra.mxu0 %v79
    %971 = vmatpush.msra.mxu0 %v78
    %972 = vmatpush.msra.mxu0 %v77
    %973 = vmatmul.f32.gmra.mxu0 %v955
    %v974 = vpop.f32.mrf.mxu0
    %v975 = vadd.f32 0.0, %v974
    %976 = vdwg.mxu0
    %v978 = vrot.slane %v975, 4
    %v980 = vadd.f32 %v133, %v978
    %v981 = vxor.u32 %v980, 2147483648
    %v982 = vmul.f32 %v981, 1.442695
    %v983 = vpow.pop %v982
    %v984 = vadd.f32 %v983, 1.0
    %v985 = vrcp.pop %v984
    %v986 = vmul.f32 %v984, %v985
    %v987 = vsub.f32 1.0, %v986
    %v988 = vmul.f32 %v985, %v987
    %v989 = vadd.f32 %v985, %v988
    %vm990 = vweird.f32 %v984
    %vm991 = vweird.f32 %v985
    %vm992 = vmor %vm990, %vm991
    %v993 = vsel %vm992, %v985, %v989
    %v994 = vand.u32 2147483647, %v984
    %vm995 = vcmp.eq.f32.partialorder %v994, 8.507059e+37
    %v996 = vand.u32 %v984, 2147483648
    %v997 = vor.u32 1.1754944e-38, %v996
    %v998 = vsel %vm995, %v997, %v993
    %v999 = vmul.f32 1.0, %v998
    %v1000 = vtanh.pop %v980
    %v1002 = vrot.slane %v874, 6
    %v1004 = vmul.f32 %v999, %v1002
    %1006 = vrot.lane.b32.xlu0 %v1000, 32
    %v1007 = vpop.permute.xlu0 %1006
    %v1009 = vmul.f32 %v999, %v1007
    %1011 = vrot.lane.b32.xlu0 %v1009, 32
    %v1012 = vpop.permute.xlu0 %1011
    %v1014 = vadd.f32 %v1004, %v1012
    %v1015 = vtanh.pop %v1014
    %1017 = vrot.lane.b32.xlu0 %v1015, 32
    %v1018 = vpop.permute.xlu0 %1017
    %v1020 = vmul.f32 %v999, %v1018
    %1022 = vrot.lane.b32.xlu0 %v1020, 64
    %v1023 = vpop.permute.xlu0 %1022
    %v1026 = vrot.slane %v951, 4
    %1027 = vrot.lane.b32.xlu0 %v1026, 96
    %v1028 = vpop.permute.xlu0 %1027
    %v1030 = vsel %vm135, %v1023, %v1028
    %v1032 = vrot.slane %v1030, 4
    %v1033 = vsel %vm202, %v1032, 0
    %1035 = vmatpush.msra.mxu0 0.0
    %1036 = vmatpush.msra.mxu0 0.0
    %1037 = vmatpush.msra.mxu0 0.0
    %1038 = vmatpush.msra.mxu0 0.0
    %1039 = vmatpush.msra.mxu0 0.0
    %1040 = vmatpush.msra.mxu0 0.0
    %1041 = vmatpush.msra.mxu0 0.0
    %1042 = vmatpush.msra.mxu0 0.0
    %1043 = vmatpush.msra.mxu0 %v88
    %1044 = vmatpush.msra.mxu0 %v87
    %1045 = vmatpush.msra.mxu0 %v86
    %1046 = vmatpush.msra.mxu0 %v85
    %1047 = vmatpush.msra.mxu0 %v84
    %1048 = vmatpush.msra.mxu0 %v83
    %1049 = vmatpush.msra.mxu0 %v82
    %1050 = vmatpush.msra.mxu0 %v81
    %1051 = vmatmul.f32.gmra.mxu0 %v1033
    %v1052 = vpop.f32.mrf.mxu0
    %v1053 = vadd.f32 %v91, %v1052
    %1054 = vdwg.mxu0
    %v1055 = vxor.u32 %v1053, 2147483648
    %v1056 = vmul.f32 %v1055, 1.442695
    %v1057 = vpow.pop %v1056
    %v1058 = vadd.f32 %v1057, 1.0
    %v1059 = vrcp.pop %v1058
    %v1060 = vmul.f32 %v1058, %v1059
    %v1061 = vsub.f32 1.0, %v1060
    %v1062 = vmul.f32 %v1059, %v1061
    %v1063 = vadd.f32 %v1059, %v1062
    %vm1064 = vweird.f32 %v1058
    %vm1065 = vweird.f32 %v1059
    %vm1066 = vmor %vm1064, %vm1065
    %v1067 = vsel %vm1066, %v1059, %v1063
    %v1068 = vand.u32 2147483647, %v1058
    %vm1069 = vcmp.eq.f32.partialorder %v1068, 8.507059e+37
    %v1070 = vand.u32 %v1058, 2147483648
    %v1071 = vor.u32 1.1754944e-38, %v1070
    %v1072 = vsel %vm1069, %v1071, %v1067
    %v1073 = vmul.f32 1.0, %v1072
    %v1074 = vtanh.pop %v1053
    %v1075 = vmul.f32 %v1073, %v945
    %1077 = vrot.lane.b32.xlu0 %v1074, 32
    %v1078 = vpop.permute.xlu0 %1077
    %v1080 = vmul.f32 %v1073, %v1078
    %1082 = vrot.lane.b32.xlu0 %v1080, 32
    %v1083 = vpop.permute.xlu0 %1082
    %v1085 = vadd.f32 %v1075, %v1083
    %v1086 = vtanh.pop %v1085
    %1088 = vrot.lane.b32.xlu0 %v1086, 32
    %v1089 = vpop.permute.xlu0 %1088
    %v1091 = vmul.f32 %v1073, %v1089
    %v1092 = vrot.slane %v1020, 4
    %1093 = vrot.lane.b32.xlu0 %v1092, 64
    %v1094 = vpop.permute.xlu0 %1093
    %v1095 = vsel %vm135, %v1094, 0
    %1097 = vmatpush.msra.mxu0 0.0
    %1098 = vmatpush.msra.mxu0 0.0
    %1099 = vmatpush.msra.mxu0 0.0
    %1100 = vmatpush.msra.mxu0 0.0
    %1101 = vmatpush.msra.mxu0 0.0
    %1102 = vmatpush.msra.mxu0 0.0
    %1103 = vmatpush.msra.mxu0 0.0
    %1104 = vmatpush.msra.mxu0 0.0
    %1105 = vmatpush.msra.mxu0 0.0
    %1106 = vmatpush.msra.mxu0 0.0
    %1107 = vmatpush.msra.mxu0 0.0
    %1108 = vmatpush.msra.mxu0 0.0
    %1109 = vmatpush.msra.mxu0 %v80
    %1110 = vmatpush.msra.mxu0 %v79
    %1111 = vmatpush.msra.mxu0 %v78
    %1112 = vmatpush.msra.mxu0 %v77
    %1113 = vmatmul.f32.gmra.mxu0 %v1095
    %v1114 = vpop.f32.mrf.mxu0
    %v1115 = vadd.f32 0.0, %v1114
    %1116 = vdwg.mxu0
    %v1118 = vrot.slane %v1115, 2
    %v1120 = vadd.f32 %v133, %v1118
    %v1121 = vxor.u32 %v1120, 2147483648
    %v1122 = vmul.f32 %v1121, 1.442695
    %v1123 = vpow.pop %v1122
    %v1124 = vadd.f32 %v1123, 1.0
    %v1125 = vrcp.pop %v1124
    %v1126 = vmul.f32 %v1124, %v1125
    %v1127 = vsub.f32 1.0, %v1126
    %v1128 = vmul.f32 %v1125, %v1127
    %v1129 = vadd.f32 %v1125, %v1128
    %vm1130 = vweird.f32 %v1124
    %vm1131 = vweird.f32 %v1125
    %vm1132 = vmor %vm1130, %vm1131
    %v1133 = vsel %vm1132, %v1125, %v1129
    %v1134 = vand.u32 2147483647, %v1124
    %vm1135 = vcmp.eq.f32.partialorder %v1134, 8.507059e+37
    %v1136 = vand.u32 %v1124, 2147483648
    %v1137 = vor.u32 1.1754944e-38, %v1136
    %v1138 = vsel %vm1135, %v1137, %v1133
    %v1139 = vmul.f32 1.0, %v1138
    %v1140 = vtanh.pop %v1120
    %v1142 = vrot.slane %v1014, 6
    %v1144 = vmul.f32 %v1139, %v1142
    %1146 = vrot.lane.b32.xlu0 %v1140, 32
    %v1147 = vpop.permute.xlu0 %1146
    %v1149 = vmul.f32 %v1139, %v1147
    %1151 = vrot.lane.b32.xlu0 %v1149, 32
    %v1152 = vpop.permute.xlu0 %1151
    %v1154 = vadd.f32 %v1144, %v1152
    %v1155 = vtanh.pop %v1154
    %1157 = vrot.lane.b32.xlu0 %v1155, 32
    %v1158 = vpop.permute.xlu0 %1157
    %v1160 = vmul.f32 %v1139, %v1158
    %1162 = vrot.lane.b32.xlu0 %v1160, 64
    %v1163 = vpop.permute.xlu0 %1162
    %v1166 = vrot.slane %v1091, 2
    %1167 = vrot.lane.b32.xlu0 %v1166, 96
    %v1168 = vpop.permute.xlu0 %1167
    %v1170 = vsel %vm135, %v1163, %v1168
    %v1172 = vrot.slane %v1170, 6
    %v1173 = vsel %vm202, %v1172, 0
    %1175 = vmatpush.msra.mxu0 0.0
    %1176 = vmatpush.msra.mxu0 0.0
    %1177 = vmatpush.msra.mxu0 0.0
    %1178 = vmatpush.msra.mxu0 0.0
    %1179 = vmatpush.msra.mxu0 0.0
    %1180 = vmatpush.msra.mxu0 0.0
    %1181 = vmatpush.msra.mxu0 0.0
    %1182 = vmatpush.msra.mxu0 0.0
    %1183 = vmatpush.msra.mxu0 %v88
    %1184 = vmatpush.msra.mxu0 %v87
    %1185 = vmatpush.msra.mxu0 %v86
    %1186 = vmatpush.msra.mxu0 %v85
    %1187 = vmatpush.msra.mxu0 %v84
    %1188 = vmatpush.msra.mxu0 %v83
    %1189 = vmatpush.msra.mxu0 %v82
    %1190 = vmatpush.msra.mxu0 %v81
    %1191 = vmatmul.f32.gmra.mxu0 %v1173
    %v1192 = vpop.f32.mrf.mxu0
    %v1193 = vadd.f32 %v91, %v1192
    %1194 = vdwg.mxu0
    %v1195 = vxor.u32 %v1193, 2147483648
    %v1196 = vmul.f32 %v1195, 1.442695
    %v1197 = vpow.pop %v1196
    %v1198 = vadd.f32 %v1197, 1.0
    %v1199 = vrcp.pop %v1198
    %v1200 = vmul.f32 %v1198, %v1199
    %v1201 = vsub.f32 1.0, %v1200
    %v1202 = vmul.f32 %v1199, %v1201
    %v1203 = vadd.f32 %v1199, %v1202
    %vm1204 = vweird.f32 %v1198
    %vm1205 = vweird.f32 %v1199
    %vm1206 = vmor %vm1204, %vm1205
    %v1207 = vsel %vm1206, %v1199, %v1203
    %v1208 = vand.u32 2147483647, %v1198
    %vm1209 = vcmp.eq.f32.partialorder %v1208, 8.507059e+37
    %v1210 = vand.u32 %v1198, 2147483648
    %v1211 = vor.u32 1.1754944e-38, %v1210
    %v1212 = vsel %vm1209, %v1211, %v1207
    %v1213 = vmul.f32 1.0, %v1212
    %v1214 = vtanh.pop %v1193
    %v1215 = vmul.f32 %v1213, %v1085
    %1217 = vrot.lane.b32.xlu0 %v1214, 32
    %v1218 = vpop.permute.xlu0 %1217
    %v1220 = vmul.f32 %v1213, %v1218
    %1222 = vrot.lane.b32.xlu0 %v1220, 32
    %v1223 = vpop.permute.xlu0 %1222
    %v1225 = vadd.f32 %v1215, %v1223
    %v1226 = vtanh.pop %v1225
    %1228 = vrot.lane.b32.xlu0 %v1226, 32
    %v1229 = vpop.permute.xlu0 %1228
    %v1231 = vmul.f32 %v1213, %v1229
    %v1232 = vld [vmem:[%s6] sm:$0xff]
    %v1233 = vld [vmem:[%s6 + $0x8] sm:$0xff]
    %v1234 = vld [vmem:[%s6 + $0x10] sm:$0xff]
    %v1235 = vld [vmem:[%s6 + $0x18] sm:$0xff]
    %v1236 = vld [vmem:[%s7] sm:$0x1]
    %v1238 = vperm.slane %v1236, 0
    %1241 = vrot.lane.b32.xlu0 %v1231, 64
    %v1242 = vpop.permute.xlu0 %1241
    %v1243 = vsel %vm135, %v1242, 0
    %1245 = vmatpush.msra.mxu0 0.0
    %1246 = vmatpush.msra.mxu0 0.0
    %1247 = vmatpush.msra.mxu0 0.0
    %1248 = vmatpush.msra.mxu0 0.0
    %1249 = vmatpush.msra.mxu0 0.0
    %1250 = vmatpush.msra.mxu0 0.0
    %1251 = vmatpush.msra.mxu0 0.0
    %1252 = vmatpush.msra.mxu0 0.0
    %1253 = vmatpush.msra.mxu0 0.0
    %1254 = vmatpush.msra.mxu0 0.0
    %1255 = vmatpush.msra.mxu0 0.0
    %1256 = vmatpush.msra.mxu0 0.0
    %1257 = vmatpush.msra.mxu0 %v1235
    %1258 = vmatpush.msra.mxu0 %v1234
    %1259 = vmatpush.msra.mxu0 %v1233
    %1260 = vmatpush.msra.mxu0 %v1232
    %1261 = vmatmul.f32.gmra.mxu0 %v1243
    %v1262 = vpop.f32.mrf.mxu0
    %v1263 = vadd.f32 %v1238, %v1262
    %1264 = vdwg.mxu0
    %vm1265 = vcmask 9216
    %1266 = vst.msk [vmem:[#allocation8] sm:$0x3] %vm1265, %v1263
    // Predicated region
    $region46: #{tpu_custom_call.1} parent=1 // pred_check
      _
    $region47: #{tpu_custom_call.1} parent=1 // pred_check_branch
      %1268 = sbr.rel (0) target = $region49
    $region48: #{tpu_custom_call.1} parent=1 // pred_region
      %1270 = vsyncadd [#allocation4], 0
      %s1272 = sshll.u32 [#allocation8], 4
      %s1273 = int_to_ptr.vmem [resolvable:$true] %s1272
      %s1274 = sshll.u32 %s8, 4
      %s1275 = int_to_ptr.hbm [resolvable:$true] %s1274
      %1277 = dma.vmem_to_hbm [thread:$0]  %s1273, 32, %s1275, [#allocation4]
    $region49: #{tpu_custom_call.1} parent=1 // pred_fallthru
      _
    // Predicated region
    $region50: #{tpu_custom_call.1} parent=1 // pred_check
      _
    $region51: #{tpu_custom_call.1} parent=1 // pred_check_branch
      %1279 = sbr.rel (0) target = $region53
    $region52: #{tpu_custom_call.1} parent=1 // pred_region
      %1281 = dma.done [#allocation4], 32
    $region53: #{tpu_custom_call.1} parent=1 // pred_fallthru
      _
    %1282 = vsyncpa [#allocation3], 1
    %1283 = vsyncpa [#allocation6], 1
    %1284 = vsyncpa [#allocation4], 1

</llo_original>
